<compile_context>
chip_gen: v6e
topology: v6e:2x2x1
jax: 0.10.0
libtpu: 0.0.40
codegen_flags: <defaults>
</compile_context>

<pallas_src>
import functools
import math

import jax
import jax.numpy as jnp
from jax import lax
from jax.experimental import pallas as pl
from jax.experimental.pallas import tpu as pltpu

_EPS = 1e-5  # nn.LayerNorm default eps


def _round_up(x, m):
    return ((x + m - 1) // m) * m


def _pick_tile(dim, cap, granularity):
    """Full-dim block when small (block == full dim is always legal); otherwise the
    largest divisor of dim that is a multiple of `granularity` and <= cap; else cap
    (caller pads — cold path, not hit at these shapes)."""
    if dim <= cap:
        return int(dim)
    t = cap
    while t >= granularity:
        if dim % t == 0:
            return int(t)
        t -= granularity
    return int(cap)


def _erf_approx(x):
    # Abramowitz & Stegun 7.1.26 (max abs err 1.5e-7). exp + VPU ops only, so it
    # lowers cleanly in Mosaic and the fused exact-GELU stays inside the matmul kernel.
    a1, a2, a3, a4, a5 = (0.254829592, -0.284496736, 1.421413741,
                          -1.453152027, 1.061405429)
    pp = 0.3275911
    ax = jnp.abs(x)
    t = 1.0 / (1.0 + pp * ax)
    poly = ((((a5 * t + a4) * t + a3) * t + a2) * t + a1) * t
    y = 1.0 - poly * jnp.exp(-ax * ax)
    return jnp.where(x < 0.0, -y, y)


def _gelu_exact(x):
    # nn.GELU default (exact erf) semantics.
    return 0.5 * x * (1.0 + _erf_approx(x * 0.7071067811865476))


# ----------------------------------------------------------------------------
# Fused (LayerNorm?) + Linear (+bias) (+GELU) (+residual) kernel — single K step
# ----------------------------------------------------------------------------
def _linear_kernel(*refs, has_ln, has_bias, has_res, apply_gelu):
    it = iter(refs)
    a_ref = next(it)
    g_ref = next(it) if has_ln else None
    b_ref = next(it) if has_ln else None
    w_ref = next(it)
    bias_ref = next(it) if has_bias else None
    res_ref = next(it) if has_res else None
    o_ref = next(it)

    if has_ln:
        x = a_ref[...].astype(jnp.float32)                       # (tm, K)
        inv_d = 1.0 / x.shape[-1]
        mean = jnp.sum(x, axis=-1, keepdims=True) * inv_d
        xc = x - mean
        var = jnp.sum(xc * xc, axis=-1, keepdims=True) * inv_d   # centered (two-pass) variance
        xn = (xc * lax.rsqrt(var + _EPS) * g_ref[...].astype(jnp.float32)
              + b_ref[...].astype(jnp.float32))
        a = xn.astype(jnp.bfloat16)                              # MXU operand
    else:
        a = a_ref[...]                                           # already bf16

    # K is un-tiled -> single MXU reduction, no accumulator scratch / phases.
    out = jnp.dot(a, w_ref[...], preferred_element_type=jnp.float32)
    if has_bias:
        out = out + bias_ref[...].astype(jnp.float32)
    if apply_gelu:
        out = _gelu_exact(out)
    if has_res:
        out = out + res_ref[...].astype(jnp.float32)
    o_ref[...] = out.astype(o_ref.dtype)


def pallas_linear(a, w, *, gamma=None, beta=None, bias=None, residual=None,
                  apply_gelu=False, out_dtype=jnp.float32):
    """out = [GELU]( LN_{gamma,beta}(a) @ w + bias ) + residual    (each part optional)

    a: (M, K) activation. w: (K, N) weight (cast to bf16 for the MXU). LN and GELU are
    fused so normalized / hidden activations never round-trip HBM.
    """
    M, K = a.shape
    K2, N = w.shape
    assert K == K2
    has_ln = gamma is not None
    has_bias = bias is not None
    has_res = residual is not None

    w_bf = w.astype(jnp.bfloat16)
    if not has_ln and a.dtype != jnp.bfloat16:
        a = a.astype(jnp.bfloat16)

    tm = _pick_tile(M, 256, 8)
    tn = _pick_tile(N, 512, 128)
    m_pad = _round_up(M, tm)
    n_pad = _round_up(N, tn)
    # TODO(synk): mask the ragged tail block instead of padding when tm/tn don't divide
    # (not hit at these shapes, so no activation pads are materialized here).
    if m_pad != M:
        a = jnp.pad(a, ((0, m_pad - M), (0, 0)))
    if n_pad != N:
        w_bf = jnp.pad(w_bf, ((0, 0), (0, n_pad - N)))

    grid = (m_pad // tm, n_pad // tn)

    in_arrays = [a]
    in_specs = [pl.BlockSpec((tm, K), lambda i, j: (i, 0))]
    vmem = 2 * tm * K * a.dtype.itemsize
    if has_ln:
        g2 = gamma.reshape(1, K).astype(jnp.float32)
        b2 = beta.reshape(1, K).astype(jnp.float32)
        in_arrays += [g2, b2]
        in_specs += [pl.BlockSpec((1, K), lambda i, j: (0, 0)),
                     pl.BlockSpec((1, K), lambda i, j: (0, 0))]
        vmem += 2 * 2 * K * 4
    in_arrays.append(w_bf)
    in_specs.append(pl.BlockSpec((K, tn), lambda i, j: (0, j)))
    vmem += 2 * K * tn * 2
    if has_bias:
        bias2 = bias.reshape(1, N).astype(jnp.float32)
        if n_pad != N:
            bias2 = jnp.pad(bias2, ((0, 0), (0, n_pad - N)))
        in_arrays.append(bias2)
        in_specs.append(pl.BlockSpec((1, tn), lambda i, j: (0, j)))
        vmem += 2 * tn * 4
    if has_res:
        r = residual.astype(jnp.float32)
        if m_pad != M or n_pad != N:
            r = jnp.pad(r, ((0, m_pad - M), (0, n_pad - N)))
        in_arrays.append(r)
        in_specs.append(pl.BlockSpec((tm, tn), lambda i, j: (i, j)))
        vmem += 2 * tm * tn * 4
    vmem += 2 * tm * tn * jnp.dtype(out_dtype).itemsize
    # footprint + headroom (v7x has only 64 MiB / TC; don't blanket-request 40 MiB).
    vmem_limit = int(min(max(vmem + (4 << 20), 8 << 20), 48 << 20))

    out = pl.pallas_call(
        functools.partial(_linear_kernel, has_ln=has_ln, has_bias=has_bias,
                          has_res=has_res, apply_gelu=apply_gelu),
        out_shape=jax.ShapeDtypeStruct((m_pad, n_pad), out_dtype),
        grid_spec=pltpu.PrefetchScalarGridSpec(
            num_scalar_prefetch=0,
            grid=grid,
            in_specs=in_specs,
            out_specs=pl.BlockSpec((tm, tn), lambda i, j: (i, j)),
        ),
        compiler_params=pltpu.CompilerParams(
            dimension_semantics=("parallel", "parallel"),
            vmem_limit_bytes=vmem_limit,
        ),
    )(*in_arrays)

    if m_pad != M or n_pad != N:
        out = out[:M, :N]
    return out


# ----------------------------------------------------------------------------
# Attention kernel: one batch element per grid step, heads looped in-kernel,
# fused KV input block, single lane-dense (nq, inner) output store.
# ----------------------------------------------------------------------------
def _attention_kernel(q_ref, kv_ref, o_ref, *, heads, dim_head):
    inner = heads * dim_head
    q = q_ref[...]                       # (nq, inner) bf16; scale folded into wq
    kv = kv_ref[...]                     # (nkv, 2*inner) bf16: [K | V]
    outs = []
    for h in range(heads):               # static unroll, heads is small
        lo = h * dim_head
        qh = q[:, lo:lo + dim_head]
        kh = kv[:, lo:lo + dim_head]
        vh = kv[:, inner + lo:inner + lo + dim_head]
        s = jnp.einsum('qd,kd->qk', qh, kh, preferred_element_type=jnp.float32)
        m = jnp.max(s, axis=-1, keepdims=True)
        p = jnp.exp(s - m)
        l = jnp.sum(p, axis=-1, keepdims=True)
        oh = jnp.dot(p.astype(kv.dtype), vh, preferred_element_type=jnp.float32)
        # Normalize the (nq, dh) output instead of the (nq, nkv) probs; recip -> EUP.
        outs.append(oh * pl.reciprocal(l, approx=True))
    # Single lane-dense (nq, inner) store (no masked 32-lane partial stores to HBM).
    o_ref[...] = jnp.concatenate(outs, axis=-1).astype(o_ref.dtype)


def pallas_attention(q3, kv3, *, heads, dim_head, out_dtype):
    """q3: (B, nq, inner) bf16, kv3: (B, nkv, 2*inner) bf16 -> (B, nq, inner)."""
    B, nq, inner = q3.shape
    nkv = kv3.shape[1]
    assert kv3.shape[2] == 2 * inner
    vmem = 2 * (q3.dtype.itemsize * nq * inner
                + kv3.dtype.itemsize * nkv * 2 * inner
                + jnp.dtype(out_dtype).itemsize * nq * inner)
    vmem_limit = int(min(max(vmem + (4 << 20), 8 << 20), 48 << 20))
    return pl.pallas_call(
        functools.partial(_attention_kernel, heads=heads, dim_head=dim_head),
        out_shape=jax.ShapeDtypeStruct((B, nq, inner), out_dtype),
        grid_spec=pltpu.PrefetchScalarGridSpec(
            num_scalar_prefetch=0,
            grid=(B,),
            in_specs=[pl.BlockSpec((None, nq, inner), lambda b: (b, 0, 0)),
                      pl.BlockSpec((None, nkv, 2 * inner), lambda b: (b, 0, 0))],
            out_specs=pl.BlockSpec((None, nq, inner), lambda b: (b, 0, 0)),
        ),
        compiler_params=pltpu.CompilerParams(
            dimension_semantics=("parallel",),
            vmem_limit_bytes=vmem_limit,
        ),
    )(q3, kv3)


# ----------------------------------------------------------------------------
# Module glue (matches the PyTorch forward semantics, dropout=0.0)
# ----------------------------------------------------------------------------
def _cross_attention_block(cfg, p, x, key_value, ln_g, ln_b):
    B, nq, D = x.shape
    nkv = key_value.shape[1]
    H, dh = cfg["heads"], cfg["dim_head"]
    inner = H * dh
    scale = dh ** (-0.5)

    x2 = x.reshape(B * nq, D)
    kv2 = key_value.reshape(B * nkv, D)

    # Fold the softmax scale into wq (weight-sized op) so the attention kernel never
    # multiplies the (nq, nkv) score matrix by a scalar.
    wq_scaled = p["wq"] * scale

    # LayerNorm fused into the q / kv projections; projections emitted in bf16.
    q = pallas_linear(x2, wq_scaled, gamma=ln_g, beta=ln_b, out_dtype=jnp.bfloat16)
    kv = pallas_linear(kv2, p["wkv"], gamma=ln_g, beta=ln_b, out_dtype=jnp.bfloat16)

    attn_dtype = jnp.bfloat16 if cfg["project_out"] else jnp.float32
    o = pallas_attention(q.reshape(B, nq, inner), kv.reshape(B, nkv, 2 * inner),
                         heads=H, dim_head=dh, out_dtype=attn_dtype)
    o2 = o.reshape(B * nq, inner)

    if cfg["project_out"]:
        # to_out Linear: bias + residual ("+ x") fused into the matmul store.
        out = pallas_linear(o2, p["wo"], bias=p["bo"], residual=x2,
                            out_dtype=jnp.float32)
    else:
        out = o2.astype(jnp.float32) + x2      # inner == dim in this configuration
    # TODO(synk): dropout (p=0.0) is identity at inference; not implemented.
    return out.reshape(B, nq, D)


def _feedforward_block(cfg, p, x, ln_g, ln_b):
    B, n, D = x.shape
    x2 = x.reshape(B * n, D)
    # LN + Linear + exact-erf GELU fused; hidden activation stored bf16 (MXU operand).
    h = pallas_linear(x2, p["w1"], gamma=ln_g, beta=ln_b, bias=p["b1"],
                      apply_gelu=True, out_dtype=jnp.bfloat16)
    out = pallas_linear(h, p["w2"], bias=p["b2"], residual=x2, out_dtype=jnp.float32)
    return out.reshape(B, n, D)


def transformer_forward(cfg, params, x, key_value):
    # TODO(synk): longer term, collapse each layer into one fused kernel that keeps the
    # x row-tile resident in VMEM and streams only weights from HBM.
    for layer in params["layers"]:
        # PreNorm_Atten: same LayerNorm params applied to both x and key_value
        # (the LN itself is fused into the q / kv projection kernels).
        x = _cross_attention_block(cfg, layer["attn"], x, key_value,
                                   layer["ln1_g"], layer["ln1_b"])
        # PreNorm + FeedForward (LN fused into the first FF matmul).
        x = _feedforward_block(cfg, layer["ff"], x, layer["ln2_g"], layer["ln2_b"])
    return x


# ----------------------------------------------------------------------------
# References
# ----------------------------------------------------------------------------
def _ln_ref(t, g, b):
    t32 = t.astype(jnp.float32)
    mean = jnp.mean(t32, axis=-1, keepdims=True)
    xc = t32 - mean
    var = jnp.mean(xc * xc, axis=-1, keepdims=True)
    return xc * lax.rsqrt(var + _EPS) * g + b


def reference_forward(cfg, params, x, key_value):
    """Pure f32, HIGHEST precision mirror of the PyTorch module (dropout=0.0)."""
    HI = lax.Precision.HIGHEST
    H, dh = cfg["heads"], cfg["dim_head"]
    inner = H * dh
    scale = dh ** (-0.5)
    for layer in params["layers"]:
        xn = _ln_ref(x, layer["ln1_g"], layer["ln1_b"])
        kvn = _ln_ref(key_value, layer["ln1_g"], layer["ln1_b"])
        ap = layer["attn"]
        B, nq, D = xn.shape
        nkv = kvn.shape[1]
        q = jnp.matmul(xn, ap["wq"], precision=HI)
        kv = jnp.matmul(kvn, ap["wkv"], precision=HI)
        k, v = kv[..., :inner], kv[..., inner:]
        qh = q.reshape(B, nq, H, dh).transpose(0, 2, 1, 3)
        kh = k.reshape(B, nkv, H, dh).transpose(0, 2, 1, 3)
        vh = v.reshape(B, nkv, H, dh).transpose(0, 2, 1, 3)
        dots = jnp.einsum('bhqd,bhkd->bhqk', qh, kh, precision=HI) * scale
        attn = jax.nn.softmax(dots, axis=-1)
        o = jnp.einsum('bhqk,bhkd->bhqd', attn, vh, precision=HI)
        o = o.transpose(0, 2, 1, 3).reshape(B, nq, inner)
        if cfg["project_out"]:
            o = jnp.matmul(o, ap["wo"], precision=HI) + ap["bo"]
        x = o + x
        fp = layer["ff"]
        xn2 = _ln_ref(x, layer["ln2_g"], layer["ln2_b"])
        h = jax.nn.gelu(jnp.matmul(xn2, fp["w1"], precision=HI) + fp["b1"],
                        approximate=False)
        x = jnp.matmul(h, fp["w2"], precision=HI) + fp["b2"] + x
    return x


def matched_reference(cfg, params, x, key_value):
    """Reference with the SAME bf16 cast points / softmax-normalization order as the
    Pallas kernels, so the comparison isolates kernel bugs from bf16 rounding."""
    H, dh = cfg["heads"], cfg["dim_head"]
    inner = H * dh
    scale = dh ** (-0.5)
    bf = jnp.bfloat16
    for layer in params["layers"]:
        ap, fp = layer["attn"], layer["ff"]
        B, nq, D = x.shape
        nkv = key_value.shape[1]
        x2 = x.reshape(B * nq, D)
        xn = _ln_ref(x, layer["ln1_g"], layer["ln1_b"]).reshape(B * nq, D).astype(bf)
        kvn = _ln_ref(key_value, layer["ln1_g"], layer["ln1_b"]
                      ).reshape(B * nkv, D).astype(bf)
        wq = (ap["wq"] * scale).astype(bf)
        q = jnp.dot(xn, wq, preferred_element_type=jnp.float32).astype(bf)
        kv = jnp.dot(kvn, ap["wkv"].astype(bf),
                     preferred_element_type=jnp.float32).astype(bf)
        qh = q.reshape(B, nq, H, dh).transpose(0, 2, 1, 3)
        kh = kv[:, :inner].reshape(B, nkv, H, dh).transpose(0, 2, 1, 3)
        vh = kv[:, inner:].reshape(B, nkv, H, dh).transpose(0, 2, 1, 3)
        s = jnp.einsum('bhqd,bhkd->bhqk', qh, kh, preferred_element_type=jnp.float32)
        m = jnp.max(s, axis=-1, keepdims=True)
        p = jnp.exp(s - m)
        l = jnp.sum(p, axis=-1, keepdims=True)
        o = jnp.einsum('bhqk,bhkd->bhqd', p.astype(bf), vh,
                       preferred_element_type=jnp.float32) / l
        o = o.transpose(0, 2, 1, 3).reshape(B * nq, inner)
        if cfg["project_out"]:
            o = (jnp.dot(o.astype(bf), ap["wo"].astype(bf),
                         preferred_element_type=jnp.float32) + ap["bo"])
        x = (o + x2).reshape(B, nq, D)
        x2 = x.reshape(B * nq, D)
        xn2 = _ln_ref(x, layer["ln2_g"], layer["ln2_b"]).reshape(B * nq, D).astype(bf)
        h = (jnp.dot(xn2, fp["w1"].astype(bf),
                     preferred_element_type=jnp.float32) + fp["b1"])
        h = jax.nn.gelu(h, approximate=False).astype(bf)
        out = (jnp.dot(h, fp["w2"].astype(bf),
                       preferred_element_type=jnp.float32) + fp["b2"])
        x = (out + x2).reshape(B, nq, D)
    return x


# ----------------------------------------------------------------------------
# Parameter init + demo
# ----------------------------------------------------------------------------
def init_params(key, cfg):
    D, H, dh = cfg["dim"], cfg["heads"], cfg["dim_head"]
    inner = H * dh
    mlp = cfg["mlp_dim"]
    layers = []
    for _ in range(cfg["depth"]):
        key, *ks = jax.random.split(key, 13)
        layers.append({
            "ln1_g": 1.0 + 0.1 * jax.random.normal(ks[0], (D,), jnp.float32),
            "ln1_b": 0.1 * jax.random.normal(ks[1], (D,), jnp.float32),
            "ln2_g": 1.0 + 0.1 * jax.random.normal(ks[2], (D,), jnp.float32),
            "ln2_b": 0.1 * jax.random.normal(ks[3], (D,), jnp.float32),
            "attn": {
                "wq": jax.random.normal(ks[4], (D, inner), jnp.float32) / math.sqrt(D),
                "wkv": jax.random.normal(ks[5], (D, 2 * inner), jnp.float32) / math.sqrt(D),
                "wo": jax.random.normal(ks[6], (inner, D), jnp.float32) / math.sqrt(inner),
                "bo": 0.02 * jax.random.normal(ks[7], (D,), jnp.float32),
            },
            "ff": {
                "w1": jax.random.normal(ks[8], (D, mlp), jnp.float32) / math.sqrt(D),
                "b1": 0.02 * jax.random.normal(ks[9], (mlp,), jnp.float32),
                "w2": jax.random.normal(ks[10], (mlp, D), jnp.float32) / math.sqrt(mlp),
                "b2": 0.02 * jax.random.normal(ks[11], (D,), jnp.float32),
            },
        })
    return {"layers": layers}


if __name__ == "__main__":
    # Small but lane-dense shapes (dim, inner_dim, mlp_dim are multiples of 128).
    cfg = dict(dim=128, depth=2, heads=4, dim_head=32, mlp_dim=256)
    cfg["project_out"] = not (cfg["heads"] == 1 and cfg["dim_head"] == cfg["dim"])

    B, NQ, NKV = 2, 8, 16
    key = jax.random.PRNGKey(0)
    kp, kx, kkv = jax.random.split(key, 3)
    params = init_params(kp, cfg)
    x = jax.random.normal(kx, (B, NQ, cfg["dim"]), dtype=jnp.float32)
    key_value = jax.random.normal(kkv, (B, NKV, cfg["dim"]), dtype=jnp.float32)

    fwd = jax.jit(functools.partial(transformer_forward, cfg))
    out = jax.block_until_ready(fwd(params, x, key_value))

    assert out.shape == (B, NQ, cfg["dim"])
    assert bool(jnp.all(jnp.isfinite(out)))

    # Tight check against a numerics-matched reference (same bf16 cast points,
    # same unnormalized-softmax order).
    ref_m = jax.block_until_ready(matched_reference(cfg, params, x, key_value))
    err_m = float(jnp.max(jnp.abs(out - ref_m)))
    assert jnp.allclose(out, ref_m, atol=2e-2, rtol=2e-2), \
        f"mismatch vs numerics-matched reference, max abs err={err_m}"

    # Sanity check against the pure-f32 HIGHEST-precision reference (difference is
    # dominated by the bf16 MXU operands).
    ref_f = jax.block_until_ready(reference_forward(cfg, params, x, key_value))
    err_f = float(jnp.max(jnp.abs(out - ref_f)))
    assert jnp.allclose(out, ref_f, atol=2e-1, rtol=2e-1), \
        f"mismatch vs f32 reference, max abs err={err_f}"

    print("KERNEL_OK")
</pallas_src>

<mosaic_0001>
module attributes {stable_mosaic.version = 11 : i64} {
  func.func @_linear_kernel(%arg0: i32, %arg1: i32, %arg2: memref<32x128xf32, #tpu.memory_space<vmem>>, %arg3: memref<1x128xf32, #tpu.memory_space<vmem>>, %arg4: memref<1x128xf32, #tpu.memory_space<vmem>>, %arg5: memref<128x256xbf16, #tpu.memory_space<vmem>>, %arg6: memref<32x256xbf16, #tpu.memory_space<vmem>>) attributes {dimension_semantics = [#tpu.dimension_semantics<parallel>, #tpu.dimension_semantics<parallel>], iteration_bounds = array<i64: 1, 1>, scalar_prefetch = 0 : i64, scratch_operands = 0 : i64, tpu.core_type = #tpu.core_type<tc>, window_params = [{transform_indices = @transform_0, window_bounds = array<i64: 32, 128>}, {pipeline_mode = #tpu.pipeline_mode<synchronous>, transform_indices = @transform_1, window_bounds = array<i64: 1, 128>}, {pipeline_mode = #tpu.pipeline_mode<synchronous>, transform_indices = @transform_2, window_bounds = array<i64: 1, 128>}, {transform_indices = @transform_3, window_bounds = array<i64: 128, 256>}, {transform_indices = @transform_4, window_bounds = array<i64: 32, 256>}]} {
    %c0 = arith.constant 0 : index
    %c0_0 = arith.constant 0 : index
    %0 = vector.load %arg2[%c0, %c0_0] : memref<32x128xf32, #tpu.memory_space<vmem>>, vector<32x128xf32>
    %cst = arith.constant dense<0.000000e+00> : vector<32xf32>
    %1 = vector.multi_reduction <add>, %0, %cst [1] : vector<32x128xf32> to vector<32xf32>
    %2 = vector.shape_cast %1 : vector<32xf32> to vector<32x1xf32>
    %cst_1 = arith.constant 7.812500e-03 : f32
    %3 = vector.broadcast %cst_1 : f32 to vector<32x1xf32>
    %4 = arith.mulf %2, %3 : vector<32x1xf32>
    %5 = vector.broadcast %4 : vector<32x1xf32> to vector<32x128xf32>
    %6 = arith.subf %0, %5 : vector<32x128xf32>
    %7 = arith.mulf %6, %6 : vector<32x128xf32>
    %cst_2 = arith.constant dense<0.000000e+00> : vector<32xf32>
    %8 = vector.multi_reduction <add>, %7, %cst_2 [1] : vector<32x128xf32> to vector<32xf32>
    %9 = vector.shape_cast %8 : vector<32xf32> to vector<32x1xf32>
    %cst_3 = arith.constant 7.812500e-03 : f32
    %10 = vector.broadcast %cst_3 : f32 to vector<32x1xf32>
    %11 = arith.mulf %9, %10 : vector<32x1xf32>
    %cst_4 = arith.constant 9.99999974E-6 : f32
    %12 = vector.broadcast %cst_4 : f32 to vector<32x1xf32>
    %13 = arith.addf %11, %12 : vector<32x1xf32>
    %14 = math.rsqrt %13 : vector<32x1xf32>
    %15 = vector.broadcast %14 : vector<32x1xf32> to vector<32x128xf32>
    %16 = arith.mulf %6, %15 : vector<32x128xf32>
    %c0_5 = arith.constant 0 : index
    %c0_6 = arith.constant 0 : index
    %17 = vector.load %arg3[%c0_5, %c0_6] : memref<1x128xf32, #tpu.memory_space<vmem>>, vector<1x128xf32>
    %18 = vector.broadcast %17 : vector<1x128xf32> to vector<32x128xf32>
    %19 = arith.mulf %16, %18 : vector<32x128xf32>
    %c0_7 = arith.constant 0 : index
    %c0_8 = arith.constant 0 : index
    %20 = vector.load %arg4[%c0_7, %c0_8] : memref<1x128xf32, #tpu.memory_space<vmem>>, vector<1x128xf32>
    %21 = vector.broadcast %20 : vector<1x128xf32> to vector<32x128xf32>
    %22 = arith.addf %19, %21 : vector<32x128xf32>
    %23 = arith.truncf %22 : vector<32x128xf32> to vector<32x128xbf16>
    %c0_9 = arith.constant 0 : index
    %c0_10 = arith.constant 0 : index
    %24 = vector.load %arg5[%c0_9, %c0_10] : memref<128x256xbf16, #tpu.memory_space<vmem>>, vector<128x256xbf16>
    %cst_11 = arith.constant dense<0.000000e+00> : vector<32x256xf32>
    %25 = tpu.matmul %23, %24, %cst_11 {dimension_numbers = #tpu.dot_dimension_numbers<[1], [0], [0], [1], [0, 0, 1, 1], [], []>} : vector<32x128xbf16>, vector<128x256xbf16>, vector<32x256xf32> -> vector<32x256xf32>
    %26 = arith.truncf %25 : vector<32x256xf32> to vector<32x256xbf16>
    %c0_12 = arith.constant 0 : index
    %c0_13 = arith.constant 0 : index
    %27 = vector.load %arg6[%c0_12, %c0_13] : memref<32x256xbf16, #tpu.memory_space<vmem>>, vector<32x256xbf16>
    tpu.vector_store %arg6[%c0_12, %c0_13], %26 {strides = array<i32>} : memref<32x256xbf16, #tpu.memory_space<vmem>>, vector<32x256xbf16>,
    return
  }
  func.func @transform_0(%arg0: i32, %arg1: i32) -> (i32, i32) {
    %c0_i32 = arith.constant 0 : i32
    %c0_i32_0 = arith.constant 0 : i32
    return %arg0, %c0_i32 : i32, i32
  }
  func.func @transform_1(%arg0: i32, %arg1: i32) -> (i32, i32) {
    %c0_i32 = arith.constant 0 : i32
    %c0_i32_0 = arith.constant 0 : i32
    %c0_i32_1 = arith.constant 0 : i32
    return %c0_i32, %c0_i32_0 : i32, i32
  }
  func.func @transform_2(%arg0: i32, %arg1: i32) -> (i32, i32) {
    %c0_i32 = arith.constant 0 : i32
    %c0_i32_0 = arith.constant 0 : i32
    %c0_i32_1 = arith.constant 0 : i32
    return %c0_i32, %c0_i32_0 : i32, i32
  }
  func.func @transform_3(%arg0: i32, %arg1: i32) -> (i32, i32) {
    %c0_i32 = arith.constant 0 : i32
    %c0_i32_0 = arith.constant 0 : i32
    return %c0_i32, %arg1 : i32, i32
  }
  func.func @transform_4(%arg0: i32, %arg1: i32) -> (i32, i32) {
    %c0_i32 = arith.constant 0 : i32
    return %arg0, %arg1 : i32, i32
  }
}

module attributes {stable_mosaic.version = 11 : i64} {
  func.func @_linear_kernel(%arg0: i32, %arg1: i32, %arg2: memref<16x128xf32, #tpu.memory_space<vmem>>, %arg3: memref<1x128xf32, #tpu.memory_space<vmem>>, %arg4: memref<1x128xf32, #tpu.memory_space<vmem>>, %arg5: memref<128x128xbf16, #tpu.memory_space<vmem>>, %arg6: memref<16x128xbf16, #tpu.memory_space<vmem>>) attributes {dimension_semantics = [#tpu.dimension_semantics<parallel>, #tpu.dimension_semantics<parallel>], iteration_bounds = array<i64: 1, 1>, scalar_prefetch = 0 : i64, scratch_operands = 0 : i64, tpu.core_type = #tpu.core_type<tc>, window_params = [{transform_indices = @transform_0, window_bounds = array<i64: 16, 128>}, {pipeline_mode = #tpu.pipeline_mode<synchronous>, transform_indices = @transform_1, window_bounds = array<i64: 1, 128>}, {pipeline_mode = #tpu.pipeline_mode<synchronous>, transform_indices = @transform_2, window_bounds = array<i64: 1, 128>}, {transform_indices = @transform_3, window_bounds = array<i64: 128, 128>}, {transform_indices = @transform_4, window_bounds = array<i64: 16, 128>}]} {
    %c0 = arith.constant 0 : index
    %c0_0 = arith.constant 0 : index
    %0 = vector.load %arg2[%c0, %c0_0] : memref<16x128xf32, #tpu.memory_space<vmem>>, vector<16x128xf32>
    %cst = arith.constant dense<0.000000e+00> : vector<16xf32>
    %1 = vector.multi_reduction <add>, %0, %cst [1] : vector<16x128xf32> to vector<16xf32>
    %2 = vector.shape_cast %1 : vector<16xf32> to vector<16x1xf32>
    %cst_1 = arith.constant 7.812500e-03 : f32
    %3 = vector.broadcast %cst_1 : f32 to vector<16x1xf32>
    %4 = arith.mulf %2, %3 : vector<16x1xf32>
    %5 = vector.broadcast %4 : vector<16x1xf32> to vector<16x128xf32>
    %6 = arith.subf %0, %5 : vector<16x128xf32>
    %7 = arith.mulf %6, %6 : vector<16x128xf32>
    %cst_2 = arith.constant dense<0.000000e+00> : vector<16xf32>
    %8 = vector.multi_reduction <add>, %7, %cst_2 [1] : vector<16x128xf32> to vector<16xf32>
    %9 = vector.shape_cast %8 : vector<16xf32> to vector<16x1xf32>
    %cst_3 = arith.constant 7.812500e-03 : f32
    %10 = vector.broadcast %cst_3 : f32 to vector<16x1xf32>
    %11 = arith.mulf %9, %10 : vector<16x1xf32>
    %cst_4 = arith.constant 9.99999974E-6 : f32
    %12 = vector.broadcast %cst_4 : f32 to vector<16x1xf32>
    %13 = arith.addf %11, %12 : vector<16x1xf32>
    %14 = math.rsqrt %13 : vector<16x1xf32>
    %15 = vector.broadcast %14 : vector<16x1xf32> to vector<16x128xf32>
    %16 = arith.mulf %6, %15 : vector<16x128xf32>
    %c0_5 = arith.constant 0 : index
    %c0_6 = arith.constant 0 : index
    %17 = vector.load %arg3[%c0_5, %c0_6] : memref<1x128xf32, #tpu.memory_space<vmem>>, vector<1x128xf32>
    %18 = vector.broadcast %17 : vector<1x128xf32> to vector<16x128xf32>
    %19 = arith.mulf %16, %18 : vector<16x128xf32>
    %c0_7 = arith.constant 0 : index
    %c0_8 = arith.constant 0 : index
    %20 = vector.load %arg4[%c0_7, %c0_8] : memref<1x128xf32, #tpu.memory_space<vmem>>, vector<1x128xf32>
    %21 = vector.broadcast %20 : vector<1x128xf32> to vector<16x128xf32>
    %22 = arith.addf %19, %21 : vector<16x128xf32>
    %23 = arith.truncf %22 : vector<16x128xf32> to vector<16x128xbf16>
    %c0_9 = arith.constant 0 : index
    %c0_10 = arith.constant 0 : index
    %24 = vector.load %arg5[%c0_9, %c0_10] : memref<128x128xbf16, #tpu.memory_space<vmem>>, vector<128x128xbf16>
    %cst_11 = arith.constant dense<0.000000e+00> : vector<16x128xf32>
    %25 = tpu.matmul %23, %24, %cst_11 {dimension_numbers = #tpu.dot_dimension_numbers<[1], [0], [0], [1], [0, 0, 1, 1], [], []>} : vector<16x128xbf16>, vector<128x128xbf16>, vector<16x128xf32> -> vector<16x128xf32>
    %26 = arith.truncf %25 : vector<16x128xf32> to vector<16x128xbf16>
    %c0_12 = arith.constant 0 : index
    %c0_13 = arith.constant 0 : index
    %27 = vector.load %arg6[%c0_12, %c0_13] : memref<16x128xbf16, #tpu.memory_space<vmem>>, vector<16x128xbf16>
    tpu.vector_store %arg6[%c0_12, %c0_13], %26 {strides = array<i32>} : memref<16x128xbf16, #tpu.memory_space<vmem>>, vector<16x128xbf16>,
    return
  }
  func.func @transform_0(%arg0: i32, %arg1: i32) -> (i32, i32) {
    %c0_i32 = arith.constant 0 : i32
    %c0_i32_0 = arith.constant 0 : i32
    return %arg0, %c0_i32 : i32, i32
  }
  func.func @transform_1(%arg0: i32, %arg1: i32) -> (i32, i32) {
    %c0_i32 = arith.constant 0 : i32
    %c0_i32_0 = arith.constant 0 : i32
    %c0_i32_1 = arith.constant 0 : i32
    return %c0_i32, %c0_i32_0 : i32, i32
  }
  func.func @transform_2(%arg0: i32, %arg1: i32) -> (i32, i32) {
    %c0_i32 = arith.constant 0 : i32
    %c0_i32_0 = arith.constant 0 : i32
    %c0_i32_1 = arith.constant 0 : i32
    return %c0_i32, %c0_i32_0 : i32, i32
  }
  func.func @transform_3(%arg0: i32, %arg1: i32) -> (i32, i32) {
    %c0_i32 = arith.constant 0 : i32
    %c0_i32_0 = arith.constant 0 : i32
    return %c0_i32, %arg1 : i32, i32
  }
  func.func @transform_4(%arg0: i32, %arg1: i32) -> (i32, i32) {
    %c0_i32 = arith.constant 0 : i32
    return %arg0, %arg1 : i32, i32
  }
}

module attributes {stable_mosaic.version = 11 : i64} {
  func.func @_attention_kernel(%arg0: i32, %arg1: memref<1x8x128xbf16, #tpu.memory_space<vmem>>, %arg2: memref<1x16x256xbf16, #tpu.memory_space<vmem>>, %arg3: memref<1x8x128xbf16, #tpu.memory_space<vmem>>) attributes {dimension_semantics = [#tpu.dimension_semantics<parallel>], iteration_bounds = array<i64: 2>, scalar_prefetch = 0 : i64, scratch_operands = 0 : i64, tpu.core_type = #tpu.core_type<tc>, window_params = [{transform_indices = @transform_0, window_bounds = array<i64: 1, 8, 128>}, {transform_indices = @transform_1, window_bounds = array<i64: 1, 16, 256>}, {transform_indices = @transform_2, window_bounds = array<i64: 1, 8, 128>}]} {
    %c0 = arith.constant 0 : index
    %c0_0 = arith.constant 0 : index
    %c0_1 = arith.constant 0 : index
    %0 = vector.load %arg1[%c0, %c0_0, %c0_1] : memref<1x8x128xbf16, #tpu.memory_space<vmem>>, vector<1x8x128xbf16>
    %1 = vector.shape_cast %0 : vector<1x8x128xbf16> to vector<8x128xbf16>
    %c0_2 = arith.constant 0 : index
    %c0_3 = arith.constant 0 : index
    %c0_4 = arith.constant 0 : index
    %2 = vector.load %arg2[%c0_2, %c0_3, %c0_4] : memref<1x16x256xbf16, #tpu.memory_space<vmem>>, vector<1x16x256xbf16>
    %3 = vector.shape_cast %2 : vector<1x16x256xbf16> to vector<16x256xbf16>
    %4 = vector.extract_strided_slice %1 {offsets = [0, 0], sizes = [8, 32], strides = [1, 1]} : vector<8x128xbf16> to vector<8x32xbf16>
    %5 = vector.extract_strided_slice %3 {offsets = [0, 0], sizes = [16, 32], strides = [1, 1]} : vector<16x256xbf16> to vector<16x32xbf16>
    %6 = vector.extract_strided_slice %3 {offsets = [0, 128], sizes = [16, 32], strides = [1, 1]} : vector<16x256xbf16> to vector<16x32xbf16>
    "tpu.trace_start"() <{level = 10 : i32, message = "qd,kd->qk"}> : () -> ()
    %cst = arith.constant dense<0.000000e+00> : vector<8x16xf32>
    %7 = tpu.matmul %4, %5, %cst {dimension_numbers = #tpu.dot_dimension_numbers<[1], [1], [0], [0], [0, 0, 1, 0], [], []>} : vector<8x32xbf16>, vector<16x32xbf16>, vector<8x16xf32> -> vector<8x16xf32>
    "tpu.trace_stop"() : () -> ()
    %cst_5 = arith.constant dense<0xFF800000> : vector<8xf32>
    %8 = vector.multi_reduction <maximumf>, %7, %cst_5 [1] : vector<8x16xf32> to vector<8xf32>
    %9 = vector.shape_cast %8 : vector<8xf32> to vector<8x1xf32>
    %10 = vector.broadcast %9 : vector<8x1xf32> to vector<8x16xf32>
    %11 = arith.subf %7, %10 : vector<8x16xf32>
    %12 = math.exp %11 : vector<8x16xf32>
    %cst_6 = arith.constant dense<0.000000e+00> : vector<8xf32>
    %13 = vector.multi_reduction <add>, %12, %cst_6 [1] : vector<8x16xf32> to vector<8xf32>
    %14 = vector.shape_cast %13 : vector<8xf32> to vector<8x1xf32>
    %15 = arith.truncf %12 : vector<8x16xf32> to vector<8x16xbf16>
    %cst_7 = arith.constant dense<0.000000e+00> : vector<8x32xf32>
    %16 = tpu.matmul %15, %6, %cst_7 {dimension_numbers = #tpu.dot_dimension_numbers<[1], [0], [0], [1], [0, 0, 1, 1], [], []>} : vector<8x16xbf16>, vector<16x32xbf16>, vector<8x32xf32> -> vector<8x32xf32>
    %17 = tpu.reciprocal %14 {approx = true} : vector<8x1xf32> -> vector<8x1xf32>
    %18 = vector.broadcast %17 : vector<8x1xf32> to vector<8x32xf32>
    %19 = arith.mulf %16, %18 : vector<8x32xf32>
    %20 = vector.extract_strided_slice %1 {offsets = [0, 32], sizes = [8, 32], strides = [1, 1]} : vector<8x128xbf16> to vector<8x32xbf16>
    %21 = vector.extract_strided_slice %3 {offsets = [0, 32], sizes = [16, 32], strides = [1, 1]} : vector<16x256xbf16> to vector<16x32xbf16>
    %22 = vector.extract_strided_slice %3 {offsets = [0, 160], sizes = [16, 32], strides = [1, 1]} : vector<16x256xbf16> to vector<16x32xbf16>
    "tpu.trace_start"() <{level = 10 : i32, message = "qd,kd->qk"}> : () -> ()
    %cst_8 = arith.constant dense<0.000000e+00> : vector<8x16xf32>
    %23 = tpu.matmul %20, %21, %cst_8 {dimension_numbers = #tpu.dot_dimension_numbers<[1], [1], [0], [0], [0, 0, 1, 0], [], []>} : vector<8x32xbf16>, vector<16x32xbf16>, vector<8x16xf32> -> vector<8x16xf32>
    "tpu.trace_stop"() : () -> ()
    %cst_9 = arith.constant dense<0xFF800000> : vector<8xf32>
    %24 = vector.multi_reduction <maximumf>, %23, %cst_9 [1] : vector<8x16xf32> to vector<8xf32>
    %25 = vector.shape_cast %24 : vector<8xf32> to vector<8x1xf32>
    %26 = vector.broadcast %25 : vector<8x1xf32> to vector<8x16xf32>
    %27 = arith.subf %23, %26 : vector<8x16xf32>
    %28 = math.exp %27 : vector<8x16xf32>
    %cst_10 = arith.constant dense<0.000000e+00> : vector<8xf32>
    %29 = vector.multi_reduction <add>, %28, %cst_10 [1] : vector<8x16xf32> to vector<8xf32>
    %30 = vector.shape_cast %29 : vector<8xf32> to vector<8x1xf32>
    %31 = arith.truncf %28 : vector<8x16xf32> to vector<8x16xbf16>
    %cst_11 = arith.constant dense<0.000000e+00> : vector<8x32xf32>
    %32 = tpu.matmul %31, %22, %cst_11 {dimension_numbers = #tpu.dot_dimension_numbers<[1], [0], [0], [1], [0, 0, 1, 1], [], []>} : vector<8x16xbf16>, vector<16x32xbf16>, vector<8x32xf32> -> vector<8x32xf32>
    %33 = tpu.reciprocal %30 {approx = true} : vector<8x1xf32> -> vector<8x1xf32>
    %34 = vector.broadcast %33 : vector<8x1xf32> to vector<8x32xf32>
    %35 = arith.mulf %32, %34 : vector<8x32xf32>
    %36 = vector.extract_strided_slice %1 {offsets = [0, 64], sizes = [8, 32], strides = [1, 1]} : vector<8x128xbf16> to vector<8x32xbf16>
    %37 = vector.extract_strided_slice %3 {offsets = [0, 64], sizes = [16, 32], strides = [1, 1]} : vector<16x256xbf16> to vector<16x32xbf16>
    %38 = vector.extract_strided_slice %3 {offsets = [0, 192], sizes = [16, 32], strides = [1, 1]} : vector<16x256xbf16> to vector<16x32xbf16>
    "tpu.trace_start"() <{level = 10 : i32, message = "qd,kd->qk"}> : () -> ()
    %cst_12 = arith.constant dense<0.000000e+00> : vector<8x16xf32>
    %39 = tpu.matmul %36, %37, %cst_12 {dimension_numbers = #tpu.dot_dimension_numbers<[1], [1], [0], [0], [0, 0, 1, 0], [], []>} : vector<8x32xbf16>, vector<16x32xbf16>, vector<8x16xf32> -> vector<8x16xf32>
    "tpu.trace_stop"() : () -> ()
    %cst_13 = arith.constant dense<0xFF800000> : vector<8xf32>
    %40 = vector.multi_reduction <maximumf>, %39, %cst_13 [1] : vector<8x16xf32> to vector<8xf32>
    %41 = vector.shape_cast %40 : vector<8xf32> to vector<8x1xf32>
    %42 = vector.broadcast %41 : vector<8x1xf32> to vector<8x16xf32>
    %43 = arith.subf %39, %42 : vector<8x16xf32>
    %44 = math.exp %43 : vector<8x16xf32>
    %cst_14 = arith.constant dense<0.000000e+00> : vector<8xf32>
    %45 = vector.multi_reduction <add>, %44, %cst_14 [1] : vector<8x16xf32> to vector<8xf32>
    %46 = vector.shape_cast %45 : vector<8xf32> to vector<8x1xf32>
    %47 = arith.truncf %44 : vector<8x16xf32> to vector<8x16xbf16>
    %cst_15 = arith.constant dense<0.000000e+00> : vector<8x32xf32>
    %48 = tpu.matmul %47, %38, %cst_15 {dimension_numbers = #tpu.dot_dimension_numbers<[1], [0], [0], [1], [0, 0, 1, 1], [], []>} : vector<8x16xbf16>, vector<16x32xbf16>, vector<8x32xf32> -> vector<8x32xf32>
    %49 = tpu.reciprocal %46 {approx = true} : vector<8x1xf32> -> vector<8x1xf32>
    %50 = vector.broadcast %49 : vector<8x1xf32> to vector<8x32xf32>
    %51 = arith.mulf %48, %50 : vector<8x32xf32>
    %52 = vector.extract_strided_slice %1 {offsets = [0, 96], sizes = [8, 32], strides = [1, 1]} : vector<8x128xbf16> to vector<8x32xbf16>
    %53 = vector.extract_strided_slice %3 {offsets = [0, 96], sizes = [16, 32], strides = [1, 1]} : vector<16x256xbf16> to vector<16x32xbf16>
    %54 = vector.extract_strided_slice %3 {offsets = [0, 224], sizes = [16, 32], strides = [1, 1]} : vector<16x256xbf16> to vector<16x32xbf16>
    "tpu.trace_start"() <{level = 10 : i32, message = "qd,kd->qk"}> : () -> ()
    %cst_16 = arith.constant dense<0.000000e+00> : vector<8x16xf32>
    %55 = tpu.matmul %52, %53, %cst_16 {dimension_numbers = #tpu.dot_dimension_numbers<[1], [1], [0], [0], [0, 0, 1, 0], [], []>} : vector<8x32xbf16>, vector<16x32xbf16>, vector<8x16xf32> -> vector<8x16xf32>
    "tpu.trace_stop"() : () -> ()
    %cst_17 = arith.constant dense<0xFF800000> : vector<8xf32>
    %56 = vector.multi_reduction <maximumf>, %55, %cst_17 [1] : vector<8x16xf32> to vector<8xf32>
    %57 = vector.shape_cast %56 : vector<8xf32> to vector<8x1xf32>
    %58 = vector.broadcast %57 : vector<8x1xf32> to vector<8x16xf32>
    %59 = arith.subf %55, %58 : vector<8x16xf32>
    %60 = math.exp %59 : vector<8x16xf32>
    %cst_18 = arith.constant dense<0.000000e+00> : vector<8xf32>
    %61 = vector.multi_reduction <add>, %60, %cst_18 [1] : vector<8x16xf32> to vector<8xf32>
    %62 = vector.shape_cast %61 : vector<8xf32> to vector<8x1xf32>
    %63 = arith.truncf %60 : vector<8x16xf32> to vector<8x16xbf16>
    %cst_19 = arith.constant dense<0.000000e+00> : vector<8x32xf32>
    %64 = tpu.matmul %63, %54, %cst_19 {dimension_numbers = #tpu.dot_dimension_numbers<[1], [0], [0], [1], [0, 0, 1, 1], [], []>} : vector<8x16xbf16>, vector<16x32xbf16>, vector<8x32xf32> -> vector<8x32xf32>
    %65 = tpu.reciprocal %62 {approx = true} : vector<8x1xf32> -> vector<8x1xf32>
    %66 = vector.broadcast %65 : vector<8x1xf32> to vector<8x32xf32>
    %67 = arith.mulf %64, %66 : vector<8x32xf32>
    %68 = tpu.concatenate %19, %35, %51, %67 in 1 : vector<8x32xf32>, vector<8x32xf32>, vector<8x32xf32>, vector<8x32xf32> -> vector<8x128xf32>
    %69 = arith.truncf %68 : vector<8x128xf32> to vector<8x128xbf16>
    %c0_20 = arith.constant 0 : index
    %c0_21 = arith.constant 0 : index
    %c0_22 = arith.constant 0 : index
    %70 = vector.load %arg3[%c0_20, %c0_21, %c0_22] : memref<1x8x128xbf16, #tpu.memory_space<vmem>>, vector<1x8x128xbf16>
    %71 = vector.shape_cast %70 : vector<1x8x128xbf16> to vector<8x128xbf16>
    %72 = vector.shape_cast %69 : vector<8x128xbf16> to vector<1x8x128xbf16>
    tpu.vector_store %arg3[%c0_20, %c0_21, %c0_22], %72 {strides = array<i32>} : memref<1x8x128xbf16, #tpu.memory_space<vmem>>, vector<1x8x128xbf16>,
    return
  }
  func.func @transform_0(%arg0: i32) -> (i32, i32, i32) {
    %c0_i32 = arith.constant 0 : i32
    %c0_i32_0 = arith.constant 0 : i32
    %c0_i32_1 = arith.constant 0 : i32
    return %arg0, %c0_i32, %c0_i32_0 : i32, i32, i32
  }
  func.func @transform_1(%arg0: i32) -> (i32, i32, i32) {
    %c0_i32 = arith.constant 0 : i32
    %c0_i32_0 = arith.constant 0 : i32
    %c0_i32_1 = arith.constant 0 : i32
    return %arg0, %c0_i32, %c0_i32_0 : i32, i32, i32
  }
  func.func @transform_2(%arg0: i32) -> (i32, i32, i32) {
    %c0_i32 = arith.constant 0 : i32
    %c0_i32_0 = arith.constant 0 : i32
    %c0_i32_1 = arith.constant 0 : i32
    return %arg0, %c0_i32, %c0_i32_0 : i32, i32, i32
  }
}

module attributes {stable_mosaic.version = 11 : i64} {
  func.func @_linear_kernel(%arg0: i32, %arg1: i32, %arg2: memref<16x128xbf16, #tpu.memory_space<vmem>>, %arg3: memref<128x128xbf16, #tpu.memory_space<vmem>>, %arg4: memref<1x128xf32, #tpu.memory_space<vmem>>, %arg5: memref<16x128xf32, #tpu.memory_space<vmem>>, %arg6: memref<16x128xf32, #tpu.memory_space<vmem>>) attributes {dimension_semantics = [#tpu.dimension_semantics<parallel>, #tpu.dimension_semantics<parallel>], iteration_bounds = array<i64: 1, 1>, scalar_prefetch = 0 : i64, scratch_operands = 0 : i64, tpu.core_type = #tpu.core_type<tc>, window_params = [{transform_indices = @transform_0, window_bounds = array<i64: 16, 128>}, {transform_indices = @transform_1, window_bounds = array<i64: 128, 128>}, {transform_indices = @transform_2, window_bounds = array<i64: 1, 128>}, {transform_indices = @transform_3, window_bounds = array<i64: 16, 128>}, {transform_indices = @transform_4, window_bounds = array<i64: 16, 128>}]} {
    %c0 = arith.constant 0 : index
    %c0_0 = arith.constant 0 : index
    %0 = vector.load %arg2[%c0, %c0_0] : memref<16x128xbf16, #tpu.memory_space<vmem>>, vector<16x128xbf16>
    %c0_1 = arith.constant 0 : index
    %c0_2 = arith.constant 0 : index
    %1 = vector.load %arg3[%c0_1, %c0_2] : memref<128x128xbf16, #tpu.memory_space<vmem>>, vector<128x128xbf16>
    %cst = arith.constant dense<0.000000e+00> : vector<16x128xf32>
    %2 = tpu.matmul %0, %1, %cst {dimension_numbers = #tpu.dot_dimension_numbers<[1], [0], [0], [1], [0, 0, 1, 1], [], []>} : vector<16x128xbf16>, vector<128x128xbf16>, vector<16x128xf32> -> vector<16x128xf32>
    %c0_3 = arith.constant 0 : index
    %c0_4 = arith.constant 0 : index
    %3 = vector.load %arg4[%c0_3, %c0_4] : memref<1x128xf32, #tpu.memory_space<vmem>>, vector<1x128xf32>
    %4 = vector.broadcast %3 : vector<1x128xf32> to vector<16x128xf32>
    %5 = arith.addf %2, %4 : vector<16x128xf32>
    %c0_5 = arith.constant 0 : index
    %c0_6 = arith.constant 0 : index
    %6 = vector.load %arg5[%c0_5, %c0_6] : memref<16x128xf32, #tpu.memory_space<vmem>>, vector<16x128xf32>
    %7 = arith.addf %5, %6 : vector<16x128xf32>
    %c0_7 = arith.constant 0 : index
    %c0_8 = arith.constant 0 : index
    %8 = vector.load %arg6[%c0_7, %c0_8] : memref<16x128xf32, #tpu.memory_space<vmem>>, vector<16x128xf32>
    tpu.vector_store %arg6[%c0_7, %c0_8], %7 {strides = array<i32>} : memref<16x128xf32, #tpu.memory_space<vmem>>, vector<16x128xf32>,
    return
  }
  func.func @transform_0(%arg0: i32, %arg1: i32) -> (i32, i32) {
    %c0_i32 = arith.constant 0 : i32
    %c0_i32_0 = arith.constant 0 : i32
    return %arg0, %c0_i32 : i32, i32
  }
  func.func @transform_1(%arg0: i32, %arg1: i32) -> (i32, i32) {
    %c0_i32 = arith.constant 0 : i32
    %c0_i32_0 = arith.constant 0 : i32
    return %c0_i32, %arg1 : i32, i32
  }
  func.func @transform_2(%arg0: i32, %arg1: i32) -> (i32, i32) {
    %c0_i32 = arith.constant 0 : i32
    %c0_i32_0 = arith.constant 0 : i32
    return %c0_i32, %arg1 : i32, i32
  }
  func.func @transform_3(%arg0: i32, %arg1: i32) -> (i32, i32) {
    %c0_i32 = arith.constant 0 : i32
    return %arg0, %arg1 : i32, i32
  }
  func.func @transform_4(%arg0: i32, %arg1: i32) -> (i32, i32) {
    %c0_i32 = arith.constant 0 : i32
    return %arg0, %arg1 : i32, i32
  }
}

module attributes {stable_mosaic.version = 11 : i64} {
  func.func @_linear_kernel(%arg0: i32, %arg1: i32, %arg2: memref<16x256xbf16, #tpu.memory_space<vmem>>, %arg3: memref<256x128xbf16, #tpu.memory_space<vmem>>, %arg4: memref<1x128xf32, #tpu.memory_space<vmem>>, %arg5: memref<16x128xf32, #tpu.memory_space<vmem>>, %arg6: memref<16x128xf32, #tpu.memory_space<vmem>>) attributes {dimension_semantics = [#tpu.dimension_semantics<parallel>, #tpu.dimension_semantics<parallel>], iteration_bounds = array<i64: 1, 1>, scalar_prefetch = 0 : i64, scratch_operands = 0 : i64, tpu.core_type = #tpu.core_type<tc>, window_params = [{transform_indices = @transform_0, window_bounds = array<i64: 16, 256>}, {transform_indices = @transform_1, window_bounds = array<i64: 256, 128>}, {transform_indices = @transform_2, window_bounds = array<i64: 1, 128>}, {transform_indices = @transform_3, window_bounds = array<i64: 16, 128>}, {transform_indices = @transform_4, window_bounds = array<i64: 16, 128>}]} {
    %c0 = arith.constant 0 : index
    %c0_0 = arith.constant 0 : index
    %0 = vector.load %arg2[%c0, %c0_0] : memref<16x256xbf16, #tpu.memory_space<vmem>>, vector<16x256xbf16>
    %c0_1 = arith.constant 0 : index
    %c0_2 = arith.constant 0 : index
    %1 = vector.load %arg3[%c0_1, %c0_2] : memref<256x128xbf16, #tpu.memory_space<vmem>>, vector<256x128xbf16>
    %cst = arith.constant dense<0.000000e+00> : vector<16x128xf32>
    %2 = tpu.matmul %0, %1, %cst {dimension_numbers = #tpu.dot_dimension_numbers<[1], [0], [0], [1], [0, 0, 1, 1], [], []>} : vector<16x256xbf16>, vector<256x128xbf16>, vector<16x128xf32> -> vector<16x128xf32>
    %c0_3 = arith.constant 0 : index
    %c0_4 = arith.constant 0 : index
    %3 = vector.load %arg4[%c0_3, %c0_4] : memref<1x128xf32, #tpu.memory_space<vmem>>, vector<1x128xf32>
    %4 = vector.broadcast %3 : vector<1x128xf32> to vector<16x128xf32>
    %5 = arith.addf %2, %4 : vector<16x128xf32>
    %c0_5 = arith.constant 0 : index
    %c0_6 = arith.constant 0 : index
    %6 = vector.load %arg5[%c0_5, %c0_6] : memref<16x128xf32, #tpu.memory_space<vmem>>, vector<16x128xf32>
    %7 = arith.addf %5, %6 : vector<16x128xf32>
    %c0_7 = arith.constant 0 : index
    %c0_8 = arith.constant 0 : index
    %8 = vector.load %arg6[%c0_7, %c0_8] : memref<16x128xf32, #tpu.memory_space<vmem>>, vector<16x128xf32>
    tpu.vector_store %arg6[%c0_7, %c0_8], %7 {strides = array<i32>} : memref<16x128xf32, #tpu.memory_space<vmem>>, vector<16x128xf32>,
    return
  }
  func.func @transform_0(%arg0: i32, %arg1: i32) -> (i32, i32) {
    %c0_i32 = arith.constant 0 : i32
    %c0_i32_0 = arith.constant 0 : i32
    return %arg0, %c0_i32 : i32, i32
  }
  func.func @transform_1(%arg0: i32, %arg1: i32) -> (i32, i32) {
    %c0_i32 = arith.constant 0 : i32
    %c0_i32_0 = arith.constant 0 : i32
    return %c0_i32, %arg1 : i32, i32
  }
  func.func @transform_2(%arg0: i32, %arg1: i32) -> (i32, i32) {
    %c0_i32 = arith.constant 0 : i32
    %c0_i32_0 = arith.constant 0 : i32
    return %c0_i32, %arg1 : i32, i32
  }
  func.func @transform_3(%arg0: i32, %arg1: i32) -> (i32, i32) {
    %c0_i32 = arith.constant 0 : i32
    return %arg0, %arg1 : i32, i32
  }
  func.func @transform_4(%arg0: i32, %arg1: i32) -> (i32, i32) {
    %c0_i32 = arith.constant 0 : i32
    return %arg0, %arg1 : i32, i32
  }
}

module attributes {stable_mosaic.version = 11 : i64} {
  func.func @_linear_kernel(%arg0: i32, %arg1: i32, %arg2: memref<16x128xf32, #tpu.memory_space<vmem>>, %arg3: memref<1x128xf32, #tpu.memory_space<vmem>>, %arg4: memref<1x128xf32, #tpu.memory_space<vmem>>, %arg5: memref<128x256xbf16, #tpu.memory_space<vmem>>, %arg6: memref<1x256xf32, #tpu.memory_space<vmem>>, %arg7: memref<16x256xbf16, #tpu.memory_space<vmem>>) attributes {dimension_semantics = [#tpu.dimension_semantics<parallel>, #tpu.dimension_semantics<parallel>], iteration_bounds = array<i64: 1, 1>, scalar_prefetch = 0 : i64, scratch_operands = 0 : i64, tpu.core_type = #tpu.core_type<tc>, window_params = [{transform_indices = @transform_0, window_bounds = array<i64: 16, 128>}, {pipeline_mode = #tpu.pipeline_mode<synchronous>, transform_indices = @transform_1, window_bounds = array<i64: 1, 128>}, {pipeline_mode = #tpu.pipeline_mode<synchronous>, transform_indices = @transform_2, window_bounds = array<i64: 1, 128>}, {transform_indices = @transform_3, window_bounds = array<i64: 128, 256>}, {transform_indices = @transform_4, window_bounds = array<i64: 1, 256>}, {transform_indices = @transform_5, window_bounds = array<i64: 16, 256>}]} {
    %c0 = arith.constant 0 : index
    %c0_0 = arith.constant 0 : index
    %0 = vector.load %arg2[%c0, %c0_0] : memref<16x128xf32, #tpu.memory_space<vmem>>, vector<16x128xf32>
    %cst = arith.constant dense<0.000000e+00> : vector<16xf32>
    %1 = vector.multi_reduction <add>, %0, %cst [1] : vector<16x128xf32> to vector<16xf32>
    %2 = vector.shape_cast %1 : vector<16xf32> to vector<16x1xf32>
    %cst_1 = arith.constant 7.812500e-03 : f32
    %3 = vector.broadcast %cst_1 : f32 to vector<16x1xf32>
    %4 = arith.mulf %2, %3 : vector<16x1xf32>
    %5 = vector.broadcast %4 : vector<16x1xf32> to vector<16x128xf32>
    %6 = arith.subf %0, %5 : vector<16x128xf32>
    %7 = arith.mulf %6, %6 : vector<16x128xf32>
    %cst_2 = arith.constant dense<0.000000e+00> : vector<16xf32>
    %8 = vector.multi_reduction <add>, %7, %cst_2 [1] : vector<16x128xf32> to vector<16xf32>
    %9 = vector.shape_cast %8 : vector<16xf32> to vector<16x1xf32>
    %cst_3 = arith.constant 7.812500e-03 : f32
    %10 = vector.broadcast %cst_3 : f32 to vector<16x1xf32>
    %11 = arith.mulf %9, %10 : vector<16x1xf32>
    %cst_4 = arith.constant 9.99999974E-6 : f32
    %12 = vector.broadcast %cst_4 : f32 to vector<16x1xf32>
    %13 = arith.addf %11, %12 : vector<16x1xf32>
    %14 = math.rsqrt %13 : vector<16x1xf32>
    %15 = vector.broadcast %14 : vector<16x1xf32> to vector<16x128xf32>
    %16 = arith.mulf %6, %15 : vector<16x128xf32>
    %c0_5 = arith.constant 0 : index
    %c0_6 = arith.constant 0 : index
    %17 = vector.load %arg3[%c0_5, %c0_6] : memref<1x128xf32, #tpu.memory_space<vmem>>, vector<1x128xf32>
    %18 = vector.broadcast %17 : vector<1x128xf32> to vector<16x128xf32>
    %19 = arith.mulf %16, %18 : vector<16x128xf32>
    %c0_7 = arith.constant 0 : index
    %c0_8 = arith.constant 0 : index
    %20 = vector.load %arg4[%c0_7, %c0_8] : memref<1x128xf32, #tpu.memory_space<vmem>>, vector<1x128xf32>
    %21 = vector.broadcast %20 : vector<1x128xf32> to vector<16x128xf32>
    %22 = arith.addf %19, %21 : vector<16x128xf32>
    %23 = arith.truncf %22 : vector<16x128xf32> to vector<16x128xbf16>
    %c0_9 = arith.constant 0 : index
    %c0_10 = arith.constant 0 : index
    %24 = vector.load %arg5[%c0_9, %c0_10] : memref<128x256xbf16, #tpu.memory_space<vmem>>, vector<128x256xbf16>
    %cst_11 = arith.constant dense<0.000000e+00> : vector<16x256xf32>
    %25 = tpu.matmul %23, %24, %cst_11 {dimension_numbers = #tpu.dot_dimension_numbers<[1], [0], [0], [1], [0, 0, 1, 1], [], []>} : vector<16x128xbf16>, vector<128x256xbf16>, vector<16x256xf32> -> vector<16x256xf32>
    %c0_12 = arith.constant 0 : index
    %c0_13 = arith.constant 0 : index
    %26 = vector.load %arg6[%c0_12, %c0_13] : memref<1x256xf32, #tpu.memory_space<vmem>>, vector<1x256xf32>
    %27 = vector.broadcast %26 : vector<1x256xf32> to vector<16x256xf32>
    %28 = arith.addf %25, %27 : vector<16x256xf32>
    %cst_14 = arith.constant 5.000000e-01 : f32
    %29 = vector.broadcast %cst_14 : f32 to vector<16x256xf32>
    %30 = arith.mulf %29, %28 : vector<16x256xf32>
    %cst_15 = arith.constant 0.707106769 : f32
    %31 = vector.broadcast %cst_15 : f32 to vector<16x256xf32>
    %32 = arith.mulf %28, %31 : vector<16x256xf32>
    %33 = math.absf %32 : vector<16x256xf32>
    %cst_16 = arith.constant 0.327591091 : f32
    %34 = vector.broadcast %cst_16 : f32 to vector<16x256xf32>
    %35 = arith.mulf %34, %33 : vector<16x256xf32>
    %cst_17 = arith.constant 1.000000e+00 : f32
    %36 = vector.broadcast %cst_17 : f32 to vector<16x256xf32>
    %37 = arith.addf %36, %35 : vector<16x256xf32>
    %cst_18 = arith.constant 1.000000e+00 : f32
    %38 = vector.broadcast %cst_18 : f32 to vector<16x256xf32>
    %39 = arith.divf %38, %37 : vector<16x256xf32>
    %cst_19 = arith.constant 1.06140542 : f32
    %40 = vector.broadcast %cst_19 : f32 to vector<16x256xf32>
    %41 = arith.mulf %40, %39 : vector<16x256xf32>
    %cst_20 = arith.constant -1.45315206 : f32
    %42 = vector.broadcast %cst_20 : f32 to vector<16x256xf32>
    %43 = arith.addf %41, %42 : vector<16x256xf32>
    %44 = arith.mulf %43, %39 : vector<16x256xf32>
    %cst_21 = arith.constant 1.42141378 : f32
    %45 = vector.broadcast %cst_21 : f32 to vector<16x256xf32>
    %46 = arith.addf %44, %45 : vector<16x256xf32>
    %47 = arith.mulf %46, %39 : vector<16x256xf32>
    %cst_22 = arith.constant -0.284496725 : f32
    %48 = vector.broadcast %cst_22 : f32 to vector<16x256xf32>
    %49 = arith.addf %47, %48 : vector<16x256xf32>
    %50 = arith.mulf %49, %39 : vector<16x256xf32>
    %cst_23 = arith.constant 0.254829586 : f32
    %51 = vector.broadcast %cst_23 : f32 to vector<16x256xf32>
    %52 = arith.addf %50, %51 : vector<16x256xf32>
    %53 = arith.mulf %52, %39 : vector<16x256xf32>
    %cst_24 = arith.constant 0.000000e+00 : f32
    %54 = vector.broadcast %cst_24 : f32 to vector<16x256xf32>
    %55 = arith.subf %54, %33 : vector<16x256xf32>
    %56 = arith.mulf %55, %33 : vector<16x256xf32>
    %57 = math.exp %56 : vector<16x256xf32>
    %58 = arith.mulf %53, %57 : vector<16x256xf32>
    %cst_25 = arith.constant 1.000000e+00 : f32
    %59 = vector.broadcast %cst_25 : f32 to vector<16x256xf32>
    %60 = arith.subf %59, %58 : vector<16x256xf32>
    %cst_26 = arith.constant 0.000000e+00 : f32
    %61 = vector.broadcast %cst_26 : f32 to vector<16x256xf32>
    %62 = arith.cmpf olt, %32, %61 : vector<16x256xf32>
    %cst_27 = arith.constant 0.000000e+00 : f32
    %63 = vector.broadcast %cst_27 : f32 to vector<16x256xf32>
    %64 = arith.subf %63, %60 : vector<16x256xf32>
    %65 = arith.select %62, %64, %60 : vector<16x256xi1>, vector<16x256xf32>
    %cst_28 = arith.constant 1.000000e+00 : f32
    %66 = vector.broadcast %cst_28 : f32 to vector<16x256xf32>
    %67 = arith.addf %66, %65 : vector<16x256xf32>
    %68 = arith.mulf %30, %67 : vector<16x256xf32>
    %69 = arith.truncf %68 : vector<16x256xf32> to vector<16x256xbf16>
    %c0_29 = arith.constant 0 : index
    %c0_30 = arith.constant 0 : index
    %70 = vector.load %arg7[%c0_29, %c0_30] : memref<16x256xbf16, #tpu.memory_space<vmem>>, vector<16x256xbf16>
    tpu.vector_store %arg7[%c0_29, %c0_30], %69 {strides = array<i32>} : memref<16x256xbf16, #tpu.memory_space<vmem>>, vector<16x256xbf16>,
    return
  }
  func.func @transform_0(%arg0: i32, %arg1: i32) -> (i32, i32) {
    %c0_i32 = arith.constant 0 : i32
    %c0_i32_0 = arith.constant 0 : i32
    return %arg0, %c0_i32 : i32, i32
  }
  func.func @transform_1(%arg0: i32, %arg1: i32) -> (i32, i32) {
    %c0_i32 = arith.constant 0 : i32
    %c0_i32_0 = arith.constant 0 : i32
    %c0_i32_1 = arith.constant 0 : i32
    return %c0_i32, %c0_i32_0 : i32, i32
  }
  func.func @transform_2(%arg0: i32, %arg1: i32) -> (i32, i32) {
    %c0_i32 = arith.constant 0 : i32
    %c0_i32_0 = arith.constant 0 : i32
    %c0_i32_1 = arith.constant 0 : i32
    return %c0_i32, %c0_i32_0 : i32, i32
  }
  func.func @transform_3(%arg0: i32, %arg1: i32) -> (i32, i32) {
    %c0_i32 = arith.constant 0 : i32
    %c0_i32_0 = arith.constant 0 : i32
    return %c0_i32, %arg1 : i32, i32
  }
  func.func @transform_4(%arg0: i32, %arg1: i32) -> (i32, i32) {
    %c0_i32 = arith.constant 0 : i32
    %c0_i32_0 = arith.constant 0 : i32
    return %c0_i32, %arg1 : i32, i32
  }
  func.func @transform_5(%arg0: i32, %arg1: i32) -> (i32, i32) {
    %c0_i32 = arith.constant 0 : i32
    return %arg0, %arg1 : i32, i32
  }
}

module attributes {stable_mosaic.version = 11 : i64} {
  func.func @_linear_kernel(%arg0: i32, %arg1: i32, %arg2: memref<16x256xbf16, #tpu.memory_space<vmem>>, %arg3: memref<256x128xbf16, #tpu.memory_space<vmem>>, %arg4: memref<1x128xf32, #tpu.memory_space<vmem>>, %arg5: memref<16x128xf32, #tpu.memory_space<vmem>>, %arg6: memref<16x128xf32, #tpu.memory_space<vmem>>) attributes {dimension_semantics = [#tpu.dimension_semantics<parallel>, #tpu.dimension_semantics<parallel>], iteration_bounds = array<i64: 1, 1>, scalar_prefetch = 0 : i64, scratch_operands = 0 : i64, tpu.core_type = #tpu.core_type<tc>, window_params = [{transform_indices = @transform_0, window_bounds = array<i64: 16, 256>}, {transform_indices = @transform_1, window_bounds = array<i64: 256, 128>}, {transform_indices = @transform_2, window_bounds = array<i64: 1, 128>}, {transform_indices = @transform_3, window_bounds = array<i64: 16, 128>}, {transform_indices = @transform_4, window_bounds = array<i64: 16, 128>}]} {
    %c0 = arith.constant 0 : index
    %c0_0 = arith.constant 0 : index
    %0 = vector.load %arg2[%c0, %c0_0] : memref<16x256xbf16, #tpu.memory_space<vmem>>, vector<16x256xbf16>
    %c0_1 = arith.constant 0 : index
    %c0_2 = arith.constant 0 : index
    %1 = vector.load %arg3[%c0_1, %c0_2] : memref<256x128xbf16, #tpu.memory_space<vmem>>, vector<256x128xbf16>
    %cst = arith.constant dense<0.000000e+00> : vector<16x128xf32>
    %2 = tpu.matmul %0, %1, %cst {dimension_numbers = #tpu.dot_dimension_numbers<[1], [0], [0], [1], [0, 0, 1, 1], [], []>} : vector<16x256xbf16>, vector<256x128xbf16>, vector<16x128xf32> -> vector<16x128xf32>
    %c0_3 = arith.constant 0 : index
    %c0_4 = arith.constant 0 : index
    %3 = vector.load %arg4[%c0_3, %c0_4] : memref<1x128xf32, #tpu.memory_space<vmem>>, vector<1x128xf32>
    %4 = vector.broadcast %3 : vector<1x128xf32> to vector<16x128xf32>
    %5 = arith.addf %2, %4 : vector<16x128xf32>
    %c0_5 = arith.constant 0 : index
    %c0_6 = arith.constant 0 : index
    %6 = vector.load %arg5[%c0_5, %c0_6] : memref<16x128xf32, #tpu.memory_space<vmem>>, vector<16x128xf32>
    %7 = arith.addf %5, %6 : vector<16x128xf32>
    %c0_7 = arith.constant 0 : index
    %c0_8 = arith.constant 0 : index
    %8 = vector.load %arg6[%c0_7, %c0_8] : memref<16x128xf32, #tpu.memory_space<vmem>>, vector<16x128xf32>
    tpu.vector_store %arg6[%c0_7, %c0_8], %7 {strides = array<i32>} : memref<16x128xf32, #tpu.memory_space<vmem>>, vector<16x128xf32>,
    return
  }
  func.func @transform_0(%arg0: i32, %arg1: i32) -> (i32, i32) {
    %c0_i32 = arith.constant 0 : i32
    %c0_i32_0 = arith.constant 0 : i32
    return %arg0, %c0_i32 : i32, i32
  }
  func.func @transform_1(%arg0: i32, %arg1: i32) -> (i32, i32) {
    %c0_i32 = arith.constant 0 : i32
    %c0_i32_0 = arith.constant 0 : i32
    return %c0_i32, %arg1 : i32, i32
  }
  func.func @transform_2(%arg0: i32, %arg1: i32) -> (i32, i32) {
    %c0_i32 = arith.constant 0 : i32
    %c0_i32_0 = arith.constant 0 : i32
    return %c0_i32, %arg1 : i32, i32
  }
  func.func @transform_3(%arg0: i32, %arg1: i32) -> (i32, i32) {
    %c0_i32 = arith.constant 0 : i32
    return %arg0, %arg1 : i32, i32
  }
  func.func @transform_4(%arg0: i32, %arg1: i32) -> (i32, i32) {
    %c0_i32 = arith.constant 0 : i32
    return %arg0, %arg1 : i32, i32
  }
}

</mosaic_0001>

<llo_original>
// kernel: transformer_forward.12
$region0: #{transformer_forward.12}
  #allocation0 [shape = 'u32[]', space=smem, size = 0x4, offset = 0x4, fixed_abs, tag = 'smem constant byte address 0x4 - core index']
  #allocation1 [shape = 'u32[144,128]{1,0:T(1,128)}', space=vmem, size = 0x12000, scoped, tag = 'internal scratch']
  %s0 = inlined_call_operand.vmem [shape: f32[16,128], index: 0, kind: input, shape index: {}]
  %s1 = inlined_call_operand.vmem [shape: f32[1,128], index: 1, kind: input, shape index: {}]
  %s2 = inlined_call_operand.vmem [shape: f32[1,128], index: 2, kind: input, shape index: {}]
  %s3 = inlined_call_operand.vmem [shape: bf16[128,128], index: 3, kind: input, shape index: {}]
  %s4 = inlined_call_operand.vmem [shape: bf16[16,128], index: 4, kind: output, shape index: {}]
  %s5 = sld [smem:[#allocation0]]
  $region26: #{transformer_forward.12} parent=0
    _
  %s7 = ssub.s32 1, %s5
  %s8 = scalar_select 0, %s7, %s5
  // Predicated region
  $region2: #{transformer_forward.12} parent=0 // pred_check
    _
  $region3: #{transformer_forward.12} parent=0 // pred_check_branch
    %10 = sbr.rel (0) target = $region5
  $region4: #{transformer_forward.12} parent=0 // pred_region
    _
  $region5: #{transformer_forward.12} parent=0 // pred_fallthru
    _
  // Predicated region
  $region6: #{transformer_forward.12} parent=0 // pred_check
    _
  $region7: #{transformer_forward.12} parent=0 // pred_check_branch
    %12 = sbr.rel (0) target = $region9
  $region8: #{transformer_forward.12} parent=0 // pred_region
    _
  $region9: #{transformer_forward.12} parent=0 // pred_fallthru
    _
  // Predicated region
  $region10: #{transformer_forward.12} parent=0 // pred_check
    _
  $region11: #{transformer_forward.12} parent=0 // pred_check_branch
    %14 = sbr.rel (0) target = $region13
  $region12: #{transformer_forward.12} parent=0 // pred_region
    _
  $region13: #{transformer_forward.12} parent=0 // pred_fallthru
    _
  // Predicated region
  $region14: #{transformer_forward.12} parent=0 // pred_check
    _
  $region15: #{transformer_forward.12} parent=0 // pred_check_branch
    %16 = sbr.rel (0) target = $region17
  $region16: #{transformer_forward.12} parent=0 // pred_region
    _
  $region17: #{transformer_forward.12} parent=0 // pred_fallthru
    _
  %v18 = vld [vmem:[%s0] sm:$0xff]
  %v19 = vld [vmem:[%s0 + $0x8] sm:$0xff]
  %20 = vadd.xlane.f32.xlu0 %v18
  %v21 = vpop.xlane.xlu0 %20
  %22 = vadd.xlane.f32.xlu0 %v19
  %v23 = vpop.xlane.xlu0 %22
  %v24 = vmul.f32 %v21, 0.0078125
  %v25 = vmul.f32 %v23, 0.0078125
  %v26 = vsub.f32 %v18, %v24
  %v27 = vsub.f32 %v19, %v25
  %v28 = vmul.f32 %v26, %v26
  %v29 = vmul.f32 %v27, %v27
  %30 = vadd.xlane.f32.xlu0 %v28
  %v31 = vpop.xlane.xlu0 %30
  %32 = vadd.xlane.f32.xlu0 %v29
  %v33 = vpop.xlane.xlu0 %32
  %v34 = vmul.f32 %v31, 0.0078125
  %v35 = vmul.f32 %v33, 0.0078125
  %v36 = vadd.f32 %v34, 1e-05
  %v37 = vadd.f32 %v35, 1e-05
  %v38 = vrsqrt.pop %v36
  %v39 = vrsqrt.pop %v37
  %v40 = vmul.f32 %v26, %v38
  %v41 = vmul.f32 %v27, %v39
  %v42 = vld [vmem:[%s1] sm:$0x1]
  %v44 = vlaneseq
  %v45 = vshrl.u32 %v44, 7
  %v46 = vsub.s32 0, %v45
  %v47 = vrot.slane %v42, %v46
  %v49 = vmul.f32 %v40, %v47
  %v50 = vmul.f32 %v41, %v47
  %v51 = vld [vmem:[%s2] sm:$0x1]
  %v53 = vlaneseq
  %v54 = vshrl.u32 %v53, 7
  %v55 = vsub.s32 0, %v54
  %v56 = vrot.slane %v51, %v55
  %v58 = vadd.f32 %v49, %v56
  %v59 = vadd.f32 %v50, %v56
  %v60 = vpack.c.bf16 %v59, %v58
  %v61 = vld [vmem:[%s3] sm:$0xf]
  %v62 = vld [vmem:[%s3 + $0x4] sm:$0xf]
  %v63 = vld [vmem:[%s3 + $0x8] sm:$0xf]
  %v64 = vld [vmem:[%s3 + $0xc] sm:$0xf]
  %v65 = vld [vmem:[%s3 + $0x10] sm:$0xf]
  %v66 = vld [vmem:[%s3 + $0x14] sm:$0xf]
  %v67 = vld [vmem:[%s3 + $0x18] sm:$0xf]
  %v68 = vld [vmem:[%s3 + $0x1c] sm:$0xf]
  %v69 = vld [vmem:[%s3 + $0x20] sm:$0xf]
  %v70 = vld [vmem:[%s3 + $0x24] sm:$0xf]
  %v71 = vld [vmem:[%s3 + $0x28] sm:$0xf]
  %v72 = vld [vmem:[%s3 + $0x2c] sm:$0xf]
  %v73 = vld [vmem:[%s3 + $0x30] sm:$0xf]
  %v74 = vld [vmem:[%s3 + $0x34] sm:$0xf]
  %v75 = vld [vmem:[%s3 + $0x38] sm:$0xf]
  %v76 = vld [vmem:[%s3 + $0x3c] sm:$0xf]
  %v93 = vunpack.c.l.b16 %v61
  %v94 = vunpack.c.l.b16 %v62
  %v95 = vunpack.c.l.b16 %v63
  %v96 = vunpack.c.l.b16 %v64
  %v97 = vunpack.c.l.b16 %v65
  %v98 = vunpack.c.l.b16 %v66
  %v99 = vunpack.c.l.b16 %v67
  %v100 = vunpack.c.l.b16 %v68
  %v101 = vunpack.c.l.b16 %v69
  %v102 = vunpack.c.l.b16 %v70
  %v103 = vunpack.c.l.b16 %v71
  %v104 = vunpack.c.l.b16 %v72
  %v105 = vunpack.c.l.b16 %v73
  %v106 = vunpack.c.l.b16 %v74
  %v107 = vunpack.c.l.b16 %v75
  %v108 = vunpack.c.l.b16 %v76
  %v109 = vpack.c.b16 %v94, %v93
  %v110 = vpack.c.b16 %v96, %v95
  %v111 = vpack.c.b16 %v98, %v97
  %v112 = vpack.c.b16 %v100, %v99
  %v113 = vpack.c.b16 %v102, %v101
  %v114 = vpack.c.b16 %v104, %v103
  %v115 = vpack.c.b16 %v106, %v105
  %v116 = vpack.c.b16 %v108, %v107
  %125 = vmatprep.subr.bf16.mxu0 0
  %126 = vmatpush1.bf16.msra.mxu0 %v116
  %127 = vmatprep.subr.bf16.mxu0 0
  %128 = vmatpush1.bf16.msra.mxu0 %v115
  %129 = vmatprep.subr.bf16.mxu0 0
  %130 = vmatpush1.bf16.msra.mxu0 %v114
  %131 = vmatprep.subr.bf16.mxu0 0
  %132 = vmatpush1.bf16.msra.mxu0 %v113
  %133 = vmatprep.subr.bf16.mxu0 0
  %134 = vmatpush1.bf16.msra.mxu0 %v112
  %135 = vmatprep.subr.bf16.mxu0 0
  %136 = vmatpush1.bf16.msra.mxu0 %v111
  %137 = vmatprep.subr.bf16.mxu0 0
  %138 = vmatpush1.bf16.msra.mxu0 %v110
  %139 = vmatprep.subr.bf16.mxu0 0
  %140 = vmatpush1.bf16.msra.mxu0 %v109
  %141 = vmatprep.subr.bf16.mxu0 0
  %142 = vmatpush2.bf16.msra.mxu0 0
  %143 = vmatprep.subr.bf16.mxu0 0
  %144 = vmatpush2.bf16.msra.mxu0 0
  %145 = vmatprep.subr.bf16.mxu0 0
  %146 = vmatpush2.bf16.msra.mxu0 0
  %147 = vmatprep.subr.bf16.mxu0 0
  %148 = vmatpush2.bf16.msra.mxu0 0
  %149 = vmatprep.subr.bf16.mxu0 0
  %150 = vmatpush2.bf16.msra.mxu0 0
  %151 = vmatprep.subr.bf16.mxu0 0
  %152 = vmatpush2.bf16.msra.mxu0 0
  %153 = vmatprep.subr.bf16.mxu0 0
  %154 = vmatpush2.bf16.msra.mxu0 0
  %155 = vmatprep.subr.bf16.mxu0 0
  %156 = vmatpush2.bf16.msra.mxu0 0
  %157 = vmatprep.mubr.bf16.mxu0 0
  %158 = vmatmul.mubr.bf16.gmra.mxu0 %v60
  %v159 = vpop.f32.mrf.mxu0
  %v160 = vadd.f32 0.0, %v159
  %v161 = vpop.f32.mrf.mxu0
  %v162 = vpop.f32.mrf.mxu0
  %v163 = vadd.f32 0.0, %v162
  %v164 = vpop.f32.mrf.mxu0
  %165 = vdwg.mxu0
  %v166 = vpack.c.bf16 %v163, %v160
  %v168 = vunpack.c.l.b16 %v166
  %v169 = vunpack.c.h.b16 %v166
  %v170 = vpack.c.b16 %v168, %v168
  %v171 = vpack.c.b16 %v169, %v169
  %174 = vst [vmem:[%s4] sm:$0xf] %v170
  %175 = vst [vmem:[%s4 + $0x4] sm:$0xf] %v171
  // Predicated region
  $region18: #{transformer_forward.12} parent=0 // pred_check
    _
  $region19: #{transformer_forward.12} parent=0 // pred_check_branch
    %177 = sbr.rel (0) target = $region21
  $region20: #{transformer_forward.12} parent=0 // pred_region
    _
  $region21: #{transformer_forward.12} parent=0 // pred_fallthru
    _
  // Predicated region
  $region22: #{transformer_forward.12} parent=0 // pred_check
    _
  $region23: #{transformer_forward.12} parent=0 // pred_check_branch
    %179 = sbr.rel (0) target = $region25
  $region24: #{transformer_forward.12} parent=0 // pred_region
    _
  $region25: #{transformer_forward.12} parent=0 // pred_fallthru
    _

// kernel: transformer_forward.14
$region0: #{transformer_forward.14}
  #allocation0 [shape = 'u32[]', space=smem, size = 0x4, offset = 0x4, fixed_abs, tag = 'smem constant byte address 0x4 - core index']
  #allocation1 [shape = 'u32[144,128]{1,0:T(1,128)}', space=vmem, size = 0x12000, scoped, tag = 'internal scratch']
  %s0 = inlined_call_operand.vmem [shape: bf16[2,8,128], index: 0, kind: input, shape index: {}]
  %s1 = inlined_call_operand.vmem [shape: bf16[2,16,256], index: 1, kind: input, shape index: {}]
  %s2 = inlined_call_operand.vmem [shape: bf16[2,8,128], index: 2, kind: output, shape index: {}]
  %s3 = sld [smem:[#allocation0]]
  $region41: #{transformer_forward.14} parent=0
    _
  %s5 = ssub.s32 1, %s3
  %s6 = scalar_select 0, %s5, %s3
  loop: start=0, step=1, limit=4
  $region2: #{transformer_forward.14} parent=0 // loop_pre_header
    _
  $region3: #{transformer_forward.14} parent=0 // loop_header
    %s8 = sphi 0, %s12
    %p9 = scmp.ge.s32.totalorder %s8, 4
    %s18 = sphi 0, %s20
    %s21 = sphi 0, %s18
    %s22 = sphi 0, %s21
    %s38 = sphi 0, %s22
    %s44 = sphi 0, %s46
    %s47 = sphi 0, %s44
    %s48 = sphi 0, %s47
    %s64 = sphi 0, %s48
    %s70 = sphi 0, %s72
    %s73 = sphi 0, %s70
    %s74 = sphi 0, %s73
    %s90 = sphi 0, %s74
  $region4: #{transformer_forward.14} parent=0 // loop_header_branch
    %11 = sbr.rel (%p9) target = $region8
  $region5: #{transformer_forward.14} parent=0 // loop_body
    %s13 = ssub.s32 %s8, 1
    %s14 = ssub.s32 %s8, 2
    %s15 = sadd.s32 %s8, 1
    %s16 = ssub.s32 %s8, %s15
    %p17 = scmp.eq.s32.totalorder %s16, 0
    %s19 = sadd.s32 %s18, 1
    %s20 = scalar_select %p17, %s18, %s19
    %p23 = pneg %p17
    %p24 = scmp.eq.s32.totalorder %s8, 1
    %p25 = por %p23, %p24
    %p26 = scmp.ne.s32.totalorder %s18, %s21
    %p27 = scmp.eq.s32.totalorder %s8, 0
    %p28 = por %p26, %p27
    %p29 = scmp.ne.s32.totalorder %s18, %s21
    %p30 = scmp.eq.s32.totalorder %s13, 1
    %p31 = por %p29, %p30
    %p32 = scmp.ne.s32.totalorder %s21, %s22
    %p33 = scmp.eq.s32.totalorder %s13, 0
    %p34 = por %p32, %p33
    %p35 = scmp.ne.s32.totalorder %s21, %s22
    %p36 = scmp.eq.s32.totalorder %s14, 1
    %p37 = por %p35, %p36
    %p39 = scmp.ne.s32.totalorder %s22, %s38
    %p40 = scmp.eq.s32.totalorder %s14, 0
    %p41 = por %p39, %p40
    %s42 = ssub.s32 %s8, %s15
    %p43 = scmp.eq.s32.totalorder %s42, 0
    %s45 = sadd.s32 %s44, 1
    %s46 = scalar_select %p43, %s44, %s45
    %p49 = pneg %p43
    %p50 = scmp.eq.s32.totalorder %s8, 1
    %p51 = por %p49, %p50
    %p52 = scmp.ne.s32.totalorder %s44, %s47
    %p53 = scmp.eq.s32.totalorder %s8, 0
    %p54 = por %p52, %p53
    %p55 = scmp.ne.s32.totalorder %s44, %s47
    %p56 = scmp.eq.s32.totalorder %s13, 1
    %p57 = por %p55, %p56
    %p58 = scmp.ne.s32.totalorder %s47, %s48
    %p59 = scmp.eq.s32.totalorder %s13, 0
    %p60 = por %p58, %p59
    %p61 = scmp.ne.s32.totalorder %s47, %s48
    %p62 = scmp.eq.s32.totalorder %s14, 1
    %p63 = por %p61, %p62
    %p65 = scmp.ne.s32.totalorder %s48, %s64
    %p66 = scmp.eq.s32.totalorder %s14, 0
    %p67 = por %p65, %p66
    %s68 = ssub.s32 %s8, %s15
    %p69 = scmp.eq.s32.totalorder %s68, 0
    %s71 = sadd.s32 %s70, 1
    %s72 = scalar_select %p69, %s70, %s71
    %p75 = pneg %p69
    %p76 = scmp.eq.s32.totalorder %s8, 1
    %p77 = por %p75, %p76
    %p78 = scmp.ne.s32.totalorder %s70, %s73
    %p79 = scmp.eq.s32.totalorder %s8, 0
    %p80 = por %p78, %p79
    %p81 = scmp.ne.s32.totalorder %s70, %s73
    %p82 = scmp.eq.s32.totalorder %s13, 1
    %p83 = por %p81, %p82
    %p84 = scmp.ne.s32.totalorder %s73, %s74
    %p85 = scmp.eq.s32.totalorder %s13, 0
    %p86 = por %p84, %p85
    %p87 = scmp.ne.s32.totalorder %s73, %s74
    %p88 = scmp.eq.s32.totalorder %s14, 1
    %p89 = por %p87, %p88
    %p91 = scmp.ne.s32.totalorder %s74, %s90
    %p92 = scmp.eq.s32.totalorder %s14, 0
    %p93 = por %p91, %p92
    %p94 = scmp.le.s32.totalorder 1, %s8
    %p95 = scmp.lt.s32.totalorder %s8, 3
    %p96 = pnand %p94, %p95
    %p97 = pneg %p96
    // Predicated region
    $region9: #{transformer_forward.14} parent=5 // pred_check
      _
    $region10: #{transformer_forward.14} parent=5 // pred_check_branch
      %99 = sbr.rel (%p96) target = $region12
    $region11: #{transformer_forward.14} parent=5 // pred_region
      %s100 = ssub.s32 %s8, 1
    $region12: #{transformer_forward.14} parent=5 // pred_fallthru
      _
    %p101 = scmp.lt.s32.totalorder %s8, 2
    // Predicated region
    $region13: #{transformer_forward.14} parent=5 // pred_check
      %p102 = pneg %p101
    $region14: #{transformer_forward.14} parent=5 // pred_check_branch
      %104 = sbr.rel (%p102) target = $region16
    $region15: #{transformer_forward.14} parent=5 // pred_region
      // Predicated region
      $region17: #{transformer_forward.14} parent=15 // pred_check
        %p105 = pneg %p28
      $region18: #{transformer_forward.14} parent=15 // pred_check_branch
        %107 = sbr.rel (%p105) target = $region20
      $region19: #{transformer_forward.14} parent=15 // pred_region
        %p108 = scmp.lt.s32.totalorder %s8, 1
        %s109 = scalar_select %p108, %s8, 1
        %s110 = smul.addr %s109, 4
        %s111 = scalar_lea.vmem %s0, %s110
      $region20: #{transformer_forward.14} parent=15 // pred_fallthru
        _
      // Predicated region
      $region21: #{transformer_forward.14} parent=15 // pred_check
        %p112 = pneg %p54
      $region22: #{transformer_forward.14} parent=15 // pred_check_branch
        %114 = sbr.rel (%p112) target = $region24
      $region23: #{transformer_forward.14} parent=15 // pred_region
        %p115 = scmp.lt.s32.totalorder %s8, 1
        %s116 = scalar_select %p115, %s8, 1
        %s117 = smul.addr %s116, 4
        %s118 = smul.addr %s117, 4
        %s119 = scalar_lea.vmem %s1, %s118
      $region24: #{transformer_forward.14} parent=15 // pred_fallthru
        _
    $region16: #{transformer_forward.14} parent=5 // pred_fallthru
      _
    %p120 = scmp.le.s32.totalorder 1, %s8
    %p121 = scmp.lt.s32.totalorder %s8, 3
    %p122 = pnand %p120, %p121
    %p123 = pneg %p122
    // Predicated region
    $region25: #{transformer_forward.14} parent=5 // pred_check
      _
    $region26: #{transformer_forward.14} parent=5 // pred_check_branch
      %125 = sbr.rel (%p122) target = $region28
    $region27: #{transformer_forward.14} parent=5 // pred_region
      %s126 = ssub.s32 %s8, 1
      %p127 = scmp.lt.s32.totalorder %s13, 1
      %s128 = scalar_select %p127, %s13, 1
      %s129 = smul.addr %s128, 4
      %s130 = scalar_lea.vmem %s0, %s129
      %p131 = pneg %p34
      %p132 = pneg %p31
      %p133 = scmp.lt.s32.totalorder %s13, 1
      %s134 = scalar_select %p133, %s13, 1
      %s135 = smul.addr %s134, 4
      %s136 = smul.addr %s135, 4
      %s137 = scalar_lea.vmem %s1, %s136
      %p138 = pneg %p60
      %p139 = pneg %p57
      %p140 = pneg %p86
      %p141 = pneg %p83
      %p142 = scmp.lt.s32.totalorder %s13, 1
      %s143 = scalar_select %p142, %s13, 1
      %s144 = smul.addr %s143, 4
      %s145 = scalar_lea.vmem %s2, %s144
      %p146 = scmp.lt.s32.totalorder %s13, 1
      %s147 = scalar_select %p146, %s13, 1
      %s148 = smul.addr %s147, 4
      %s149 = scalar_lea.vmem %s0, %s148
      %p150 = scmp.lt.s32.totalorder %s13, 1
      %s151 = scalar_select %p150, %s13, 1
      %s152 = smul.addr %s151, 4
      %s153 = smul.addr %s152, 4
      %s154 = scalar_lea.vmem %s1, %s153
      %p155 = scmp.lt.s32.totalorder %s13, 1
      %s156 = scalar_select %p155, %s13, 1
      %s157 = smul.addr %s156, 4
      %s158 = scalar_lea.vmem %s2, %s157
      %v160 = vld [vmem:[%s149] sm:$0xf]
      %v161 = vld [vmem:[%s154] sm:$0xff]
      %v162 = vld [vmem:[%s154 + $0x8] sm:$0xff]
      %v165 = vunpack.c.l.b16 %v161
      %v166 = vunpack.c.l.b16 %v162
      %v167 = vpack.c.b16 %v166, %v165
      %vm168 = vcmask 261120
      %v170 = vsel %vm168, %v160, 0
      %v173 = vsel %vm168, %v167, 0
      %175 = vmatprep.subr.bf16.mxu0 0
      %176 = vmatpush1.bf16.xpose.msra.mxu0 0
      %177 = vmatprep.subr.bf16.mxu0 0
      %178 = vmatpush1.bf16.xpose.msra.mxu0 0
      %179 = vmatprep.subr.bf16.mxu0 0
      %180 = vmatpush1.bf16.xpose.msra.mxu0 0
      %181 = vmatprep.subr.bf16.mxu0 0
      %182 = vmatpush1.bf16.xpose.msra.mxu0 0
      %183 = vmatprep.subr.bf16.mxu0 0
      %184 = vmatpush1.bf16.xpose.msra.mxu0 0
      %185 = vmatprep.subr.bf16.mxu0 0
      %186 = vmatpush1.bf16.xpose.msra.mxu0 0
      %187 = vmatprep.subr.bf16.mxu0 0
      %188 = vmatpush1.bf16.xpose.msra.mxu0 0
      %189 = vmatprep.subr.bf16.mxu0 0
      %190 = vmatpush1.bf16.xpose.msra.mxu0 %v173
      %191 = vmatprep.subr.bf16.mxu0 0
      %192 = vmatpush2.bf16.xpose.msra.mxu0 0
      %193 = vmatprep.subr.bf16.mxu0 0
      %194 = vmatpush2.bf16.xpose.msra.mxu0 0
      %195 = vmatprep.subr.bf16.mxu0 0
      %196 = vmatpush2.bf16.xpose.msra.mxu0 0
      %197 = vmatprep.subr.bf16.mxu0 0
      %198 = vmatpush2.bf16.xpose.msra.mxu0 0
      %199 = vmatprep.subr.bf16.mxu0 0
      %200 = vmatpush2.bf16.xpose.msra.mxu0 0
      %201 = vmatprep.subr.bf16.mxu0 0
      %202 = vmatpush2.bf16.xpose.msra.mxu0 0
      %203 = vmatprep.subr.bf16.mxu0 0
      %204 = vmatpush2.bf16.xpose.msra.mxu0 0
      %205 = vmatprep.subr.bf16.mxu0 0
      %206 = vmatpush2.bf16.xpose.msra.mxu0 0
      %207 = vmatprep.mubr.bf16.mxu0 0
      %208 = vmatmul.mubr.bf16.gmra.mxu0 %v170
      %v209 = vpop.f32.mrf.mxu0
      %v210 = vadd.f32 0.0, %v209
      %v211 = vpop.f32.mrf.mxu0
      %v212 = vpop.f32.mrf.mxu0
      %v213 = vpop.f32.mrf.mxu0
      %214 = vdwg.mxu0
      %vm215 = vcmask 130048
      %v216 = vsel %vm215, %v210, -inf
      %217 = vmax.xlane.f32.xlu0 %v216
      %v218 = vpop.xlane.xlu0 %217
      %v219 = vsub.f32 %v210, %v218
      %v220 = vmul.f32 %v219, 1.442695
      %v221 = vpow.pop %v220
      %v222 = vsel %vm215, %v221, 0.0
      %223 = vadd.xlane.f32.xlu0 %v222
      %v224 = vpop.xlane.xlu0 %223
      %v225 = vpack.c.bf16 %v221, %v221
      %v226 = vunpack.c.h.b16 %v161
      %v227 = vunpack.c.h.b16 %v162
      %v228 = vpack.c.b16 %v227, %v226
      %v231 = vsel %vm215, %v225, 0
      %233 = vmatprep.subr.bf16.mxu0 0
      %234 = vmatpush1.bf16.msra.mxu0 0
      %235 = vmatprep.subr.bf16.mxu0 0
      %236 = vmatpush1.bf16.msra.mxu0 0
      %237 = vmatprep.subr.bf16.mxu0 0
      %238 = vmatpush1.bf16.msra.mxu0 0
      %239 = vmatprep.subr.bf16.mxu0 0
      %240 = vmatpush1.bf16.msra.mxu0 0
      %241 = vmatprep.subr.bf16.mxu0 0
      %242 = vmatpush1.bf16.msra.mxu0 0
      %243 = vmatprep.subr.bf16.mxu0 0
      %244 = vmatpush1.bf16.msra.mxu0 0
      %245 = vmatprep.subr.bf16.mxu0 0
      %246 = vmatpush1.bf16.msra.mxu0 0
      %247 = vmatprep.subr.bf16.mxu0 0
      %248 = vmatpush1.bf16.msra.mxu0 %v228
      %249 = vmatprep.subr.bf16.mxu0 0
      %250 = vmatpush2.bf16.msra.mxu0 0
      %251 = vmatprep.subr.bf16.mxu0 0
      %252 = vmatpush2.bf16.msra.mxu0 0
      %253 = vmatprep.subr.bf16.mxu0 0
      %254 = vmatpush2.bf16.msra.mxu0 0
      %255 = vmatprep.subr.bf16.mxu0 0
      %256 = vmatpush2.bf16.msra.mxu0 0
      %257 = vmatprep.subr.bf16.mxu0 0
      %258 = vmatpush2.bf16.msra.mxu0 0
      %259 = vmatprep.subr.bf16.mxu0 0
      %260 = vmatpush2.bf16.msra.mxu0 0
      %261 = vmatprep.subr.bf16.mxu0 0
      %262 = vmatpush2.bf16.msra.mxu0 0
      %263 = vmatprep.subr.bf16.mxu0 0
      %264 = vmatpush2.bf16.msra.mxu0 0
      %265 = vmatprep.mubr.bf16.mxu0 0
      %266 = vmatmul.mubr.bf16.gmra.mxu0 %v231
      %v267 = vpop.f32.mrf.mxu0
      %v268 = vadd.f32 0.0, %v267
      %v269 = vpop.f32.mrf.mxu0
      %v270 = vpop.f32.mrf.mxu0
      %v271 = vpop.f32.mrf.mxu0
      %272 = vdwg.mxu0
      %v273 = vrcp.pop %v224
      %v274 = vmul.f32 %v268, %v273
      %v276 = vunpack.c.l.b16 %v160
      %v277 = vpack.c.b16 %v276, %v276
      %278 = vrot.lane.b32.xlu0 %v277, 96
      %v279 = vpop.permute.xlu0 %278
      %280 = vrot.lane.b32.xlu0 %v167, 96
      %v281 = vpop.permute.xlu0 %280
      %v283 = vsel %vm168, %v279, 0
      %v286 = vsel %vm168, %v281, 0
      %288 = vmatprep.subr.bf16.mxu0 0
      %289 = vmatpush1.bf16.xpose.msra.mxu0 0
      %290 = vmatprep.subr.bf16.mxu0 0
      %291 = vmatpush1.bf16.xpose.msra.mxu0 0
      %292 = vmatprep.subr.bf16.mxu0 0
      %293 = vmatpush1.bf16.xpose.msra.mxu0 0
      %294 = vmatprep.subr.bf16.mxu0 0
      %295 = vmatpush1.bf16.xpose.msra.mxu0 0
      %296 = vmatprep.subr.bf16.mxu0 0
      %297 = vmatpush1.bf16.xpose.msra.mxu0 0
      %298 = vmatprep.subr.bf16.mxu0 0
      %299 = vmatpush1.bf16.xpose.msra.mxu0 0
      %300 = vmatprep.subr.bf16.mxu0 0
      %301 = vmatpush1.bf16.xpose.msra.mxu0 0
      %302 = vmatprep.subr.bf16.mxu0 0
      %303 = vmatpush1.bf16.xpose.msra.mxu0 %v286
      %304 = vmatprep.subr.bf16.mxu0 0
      %305 = vmatpush2.bf16.xpose.msra.mxu0 0
      %306 = vmatprep.subr.bf16.mxu0 0
      %307 = vmatpush2.bf16.xpose.msra.mxu0 0
      %308 = vmatprep.subr.bf16.mxu0 0
      %309 = vmatpush2.bf16.xpose.msra.mxu0 0
      %310 = vmatprep.subr.bf16.mxu0 0
      %311 = vmatpush2.bf16.xpose.msra.mxu0 0
      %312 = vmatprep.subr.bf16.mxu0 0
      %313 = vmatpush2.bf16.xpose.msra.mxu0 0
      %314 = vmatprep.subr.bf16.mxu0 0
      %315 = vmatpush2.bf16.xpose.msra.mxu0 0
      %316 = vmatprep.subr.bf16.mxu0 0
      %317 = vmatpush2.bf16.xpose.msra.mxu0 0
      %318 = vmatprep.subr.bf16.mxu0 0
      %319 = vmatpush2.bf16.xpose.msra.mxu0 0
      %320 = vmatprep.mubr.bf16.mxu0 0
      %321 = vmatmul.mubr.bf16.gmra.mxu0 %v283
      %v322 = vpop.f32.mrf.mxu0
      %v323 = vadd.f32 0.0, %v322
      %v324 = vpop.f32.mrf.mxu0
      %v325 = vpop.f32.mrf.mxu0
      %v326 = vpop.f32.mrf.mxu0
      %327 = vdwg.mxu0
      %v328 = vsel %vm215, %v323, -inf
      %329 = vmax.xlane.f32.xlu0 %v328
      %v330 = vpop.xlane.xlu0 %329
      %v331 = vsub.f32 %v323, %v330
      %v332 = vmul.f32 %v331, 1.442695
      %v333 = vpow.pop %v332
      %v334 = vsel %vm215, %v333, 0.0
      %335 = vadd.xlane.f32.xlu0 %v334
      %v336 = vpop.xlane.xlu0 %335
      %v337 = vpack.c.bf16 %v333, %v333
      %338 = vrot.lane.b32.xlu0 %v228, 96
      %v339 = vpop.permute.xlu0 %338
      %v342 = vsel %vm215, %v337, 0
      %344 = vmatprep.subr.bf16.mxu0 0
      %345 = vmatpush1.bf16.msra.mxu0 0
      %346 = vmatprep.subr.bf16.mxu0 0
      %347 = vmatpush1.bf16.msra.mxu0 0
      %348 = vmatprep.subr.bf16.mxu0 0
      %349 = vmatpush1.bf16.msra.mxu0 0
      %350 = vmatprep.subr.bf16.mxu0 0
      %351 = vmatpush1.bf16.msra.mxu0 0
      %352 = vmatprep.subr.bf16.mxu0 0
      %353 = vmatpush1.bf16.msra.mxu0 0
      %354 = vmatprep.subr.bf16.mxu0 0
      %355 = vmatpush1.bf16.msra.mxu0 0
      %356 = vmatprep.subr.bf16.mxu0 0
      %357 = vmatpush1.bf16.msra.mxu0 0
      %358 = vmatprep.subr.bf16.mxu0 0
      %359 = vmatpush1.bf16.msra.mxu0 %v339
      %360 = vmatprep.subr.bf16.mxu0 0
      %361 = vmatpush2.bf16.msra.mxu0 0
      %362 = vmatprep.subr.bf16.mxu0 0
      %363 = vmatpush2.bf16.msra.mxu0 0
      %364 = vmatprep.subr.bf16.mxu0 0
      %365 = vmatpush2.bf16.msra.mxu0 0
      %366 = vmatprep.subr.bf16.mxu0 0
      %367 = vmatpush2.bf16.msra.mxu0 0
      %368 = vmatprep.subr.bf16.mxu0 0
      %369 = vmatpush2.bf16.msra.mxu0 0
      %370 = vmatprep.subr.bf16.mxu0 0
      %371 = vmatpush2.bf16.msra.mxu0 0
      %372 = vmatprep.subr.bf16.mxu0 0
      %373 = vmatpush2.bf16.msra.mxu0 0
      %374 = vmatprep.subr.bf16.mxu0 0
      %375 = vmatpush2.bf16.msra.mxu0 0
      %376 = vmatprep.mubr.bf16.mxu0 0
      %377 = vmatmul.mubr.bf16.gmra.mxu0 %v342
      %v378 = vpop.f32.mrf.mxu0
      %v379 = vadd.f32 0.0, %v378
      %v380 = vpop.f32.mrf.mxu0
      %v381 = vpop.f32.mrf.mxu0
      %v382 = vpop.f32.mrf.mxu0
      %383 = vdwg.mxu0
      %v384 = vrcp.pop %v336
      %v385 = vmul.f32 %v379, %v384
      %386 = vrot.lane.b32.xlu0 %v277, 64
      %v387 = vpop.permute.xlu0 %386
      %388 = vrot.lane.b32.xlu0 %v167, 64
      %v389 = vpop.permute.xlu0 %388
      %v391 = vsel %vm168, %v387, 0
      %v394 = vsel %vm168, %v389, 0
      %396 = vmatprep.subr.bf16.mxu0 0
      %397 = vmatpush1.bf16.xpose.msra.mxu0 0
      %398 = vmatprep.subr.bf16.mxu0 0
      %399 = vmatpush1.bf16.xpose.msra.mxu0 0
      %400 = vmatprep.subr.bf16.mxu0 0
      %401 = vmatpush1.bf16.xpose.msra.mxu0 0
      %402 = vmatprep.subr.bf16.mxu0 0
      %403 = vmatpush1.bf16.xpose.msra.mxu0 0
      %404 = vmatprep.subr.bf16.mxu0 0
      %405 = vmatpush1.bf16.xpose.msra.mxu0 0
      %406 = vmatprep.subr.bf16.mxu0 0
      %407 = vmatpush1.bf16.xpose.msra.mxu0 0
      %408 = vmatprep.subr.bf16.mxu0 0
      %409 = vmatpush1.bf16.xpose.msra.mxu0 0
      %410 = vmatprep.subr.bf16.mxu0 0
      %411 = vmatpush1.bf16.xpose.msra.mxu0 %v394
      %412 = vmatprep.subr.bf16.mxu0 0
      %413 = vmatpush2.bf16.xpose.msra.mxu0 0
      %414 = vmatprep.subr.bf16.mxu0 0
      %415 = vmatpush2.bf16.xpose.msra.mxu0 0
      %416 = vmatprep.subr.bf16.mxu0 0
      %417 = vmatpush2.bf16.xpose.msra.mxu0 0
      %418 = vmatprep.subr.bf16.mxu0 0
      %419 = vmatpush2.bf16.xpose.msra.mxu0 0
      %420 = vmatprep.subr.bf16.mxu0 0
      %421 = vmatpush2.bf16.xpose.msra.mxu0 0
      %422 = vmatprep.subr.bf16.mxu0 0
      %423 = vmatpush2.bf16.xpose.msra.mxu0 0
      %424 = vmatprep.subr.bf16.mxu0 0
      %425 = vmatpush2.bf16.xpose.msra.mxu0 0
      %426 = vmatprep.subr.bf16.mxu0 0
      %427 = vmatpush2.bf16.xpose.msra.mxu0 0
      %428 = vmatprep.mubr.bf16.mxu0 0
      %429 = vmatmul.mubr.bf16.gmra.mxu0 %v391
      %v430 = vpop.f32.mrf.mxu0
      %v431 = vadd.f32 0.0, %v430
      %v432 = vpop.f32.mrf.mxu0
      %v433 = vpop.f32.mrf.mxu0
      %v434 = vpop.f32.mrf.mxu0
      %435 = vdwg.mxu0
      %v436 = vsel %vm215, %v431, -inf
      %437 = vmax.xlane.f32.xlu0 %v436
      %v438 = vpop.xlane.xlu0 %437
      %v439 = vsub.f32 %v431, %v438
      %v440 = vmul.f32 %v439, 1.442695
      %v441 = vpow.pop %v440
      %v442 = vsel %vm215, %v441, 0.0
      %443 = vadd.xlane.f32.xlu0 %v442
      %v444 = vpop.xlane.xlu0 %443
      %v445 = vpack.c.bf16 %v441, %v441
      %446 = vrot.lane.b32.xlu0 %v228, 64
      %v447 = vpop.permute.xlu0 %446
      %v450 = vsel %vm215, %v445, 0
      %452 = vmatprep.subr.bf16.mxu0 0
      %453 = vmatpush1.bf16.msra.mxu0 0
      %454 = vmatprep.subr.bf16.mxu0 0
      %455 = vmatpush1.bf16.msra.mxu0 0
      %456 = vmatprep.subr.bf16.mxu0 0
      %457 = vmatpush1.bf16.msra.mxu0 0
      %458 = vmatprep.subr.bf16.mxu0 0
      %459 = vmatpush1.bf16.msra.mxu0 0
      %460 = vmatprep.subr.bf16.mxu0 0
      %461 = vmatpush1.bf16.msra.mxu0 0
      %462 = vmatprep.subr.bf16.mxu0 0
      %463 = vmatpush1.bf16.msra.mxu0 0
      %464 = vmatprep.subr.bf16.mxu0 0
      %465 = vmatpush1.bf16.msra.mxu0 0
      %466 = vmatprep.subr.bf16.mxu0 0
      %467 = vmatpush1.bf16.msra.mxu0 %v447
      %468 = vmatprep.subr.bf16.mxu0 0
      %469 = vmatpush2.bf16.msra.mxu0 0
      %470 = vmatprep.subr.bf16.mxu0 0
      %471 = vmatpush2.bf16.msra.mxu0 0
      %472 = vmatprep.subr.bf16.mxu0 0
      %473 = vmatpush2.bf16.msra.mxu0 0
      %474 = vmatprep.subr.bf16.mxu0 0
      %475 = vmatpush2.bf16.msra.mxu0 0
      %476 = vmatprep.subr.bf16.mxu0 0
      %477 = vmatpush2.bf16.msra.mxu0 0
      %478 = vmatprep.subr.bf16.mxu0 0
      %479 = vmatpush2.bf16.msra.mxu0 0
      %480 = vmatprep.subr.bf16.mxu0 0
      %481 = vmatpush2.bf16.msra.mxu0 0
      %482 = vmatprep.subr.bf16.mxu0 0
      %483 = vmatpush2.bf16.msra.mxu0 0
      %484 = vmatprep.mubr.bf16.mxu0 0
      %485 = vmatmul.mubr.bf16.gmra.mxu0 %v450
      %v486 = vpop.f32.mrf.mxu0
      %v487 = vadd.f32 0.0, %v486
      %v488 = vpop.f32.mrf.mxu0
      %v489 = vpop.f32.mrf.mxu0
      %v490 = vpop.f32.mrf.mxu0
      %491 = vdwg.mxu0
      %v492 = vrcp.pop %v444
      %v493 = vmul.f32 %v487, %v492
      %494 = vrot.lane.b32.xlu0 %v277, 32
      %v495 = vpop.permute.xlu0 %494
      %496 = vrot.lane.b32.xlu0 %v167, 32
      %v497 = vpop.permute.xlu0 %496
      %v499 = vsel %vm168, %v495, 0
      %v502 = vsel %vm168, %v497, 0
      %504 = vmatprep.subr.bf16.mxu0 0
      %505 = vmatpush1.bf16.xpose.msra.mxu0 0
      %506 = vmatprep.subr.bf16.mxu0 0
      %507 = vmatpush1.bf16.xpose.msra.mxu0 0
      %508 = vmatprep.subr.bf16.mxu0 0
      %509 = vmatpush1.bf16.xpose.msra.mxu0 0
      %510 = vmatprep.subr.bf16.mxu0 0
      %511 = vmatpush1.bf16.xpose.msra.mxu0 0
      %512 = vmatprep.subr.bf16.mxu0 0
      %513 = vmatpush1.bf16.xpose.msra.mxu0 0
      %514 = vmatprep.subr.bf16.mxu0 0
      %515 = vmatpush1.bf16.xpose.msra.mxu0 0
      %516 = vmatprep.subr.bf16.mxu0 0
      %517 = vmatpush1.bf16.xpose.msra.mxu0 0
      %518 = vmatprep.subr.bf16.mxu0 0
      %519 = vmatpush1.bf16.xpose.msra.mxu0 %v502
      %520 = vmatprep.subr.bf16.mxu0 0
      %521 = vmatpush2.bf16.xpose.msra.mxu0 0
      %522 = vmatprep.subr.bf16.mxu0 0
      %523 = vmatpush2.bf16.xpose.msra.mxu0 0
      %524 = vmatprep.subr.bf16.mxu0 0
      %525 = vmatpush2.bf16.xpose.msra.mxu0 0
      %526 = vmatprep.subr.bf16.mxu0 0
      %527 = vmatpush2.bf16.xpose.msra.mxu0 0
      %528 = vmatprep.subr.bf16.mxu0 0
      %529 = vmatpush2.bf16.xpose.msra.mxu0 0
      %530 = vmatprep.subr.bf16.mxu0 0
      %531 = vmatpush2.bf16.xpose.msra.mxu0 0
      %532 = vmatprep.subr.bf16.mxu0 0
      %533 = vmatpush2.bf16.xpose.msra.mxu0 0
      %534 = vmatprep.subr.bf16.mxu0 0
      %535 = vmatpush2.bf16.xpose.msra.mxu0 0
      %536 = vmatprep.mubr.bf16.mxu0 0
      %537 = vmatmul.mubr.bf16.gmra.mxu0 %v499
      %v538 = vpop.f32.mrf.mxu0
      %v539 = vadd.f32 0.0, %v538
      %v540 = vpop.f32.mrf.mxu0
      %v541 = vpop.f32.mrf.mxu0
      %v542 = vpop.f32.mrf.mxu0
      %543 = vdwg.mxu0
      %v544 = vsel %vm215, %v539, -inf
      %545 = vmax.xlane.f32.xlu0 %v544
      %v546 = vpop.xlane.xlu0 %545
      %v547 = vsub.f32 %v539, %v546
      %v548 = vmul.f32 %v547, 1.442695
      %v549 = vpow.pop %v548
      %v550 = vsel %vm215, %v549, 0.0
      %551 = vadd.xlane.f32.xlu0 %v550
      %v552 = vpop.xlane.xlu0 %551
      %v553 = vpack.c.bf16 %v549, %v549
      %554 = vrot.lane.b32.xlu0 %v228, 32
      %v555 = vpop.permute.xlu0 %554
      %v558 = vsel %vm215, %v553, 0
      %560 = vmatprep.subr.bf16.mxu0 0
      %561 = vmatpush1.bf16.msra.mxu0 0
      %562 = vmatprep.subr.bf16.mxu0 0
      %563 = vmatpush1.bf16.msra.mxu0 0
      %564 = vmatprep.subr.bf16.mxu0 0
      %565 = vmatpush1.bf16.msra.mxu0 0
      %566 = vmatprep.subr.bf16.mxu0 0
      %567 = vmatpush1.bf16.msra.mxu0 0
      %568 = vmatprep.subr.bf16.mxu0 0
      %569 = vmatpush1.bf16.msra.mxu0 0
      %570 = vmatprep.subr.bf16.mxu0 0
      %571 = vmatpush1.bf16.msra.mxu0 0
      %572 = vmatprep.subr.bf16.mxu0 0
      %573 = vmatpush1.bf16.msra.mxu0 0
      %574 = vmatprep.subr.bf16.mxu0 0
      %575 = vmatpush1.bf16.msra.mxu0 %v555
      %576 = vmatprep.subr.bf16.mxu0 0
      %577 = vmatpush2.bf16.msra.mxu0 0
      %578 = vmatprep.subr.bf16.mxu0 0
      %579 = vmatpush2.bf16.msra.mxu0 0
      %580 = vmatprep.subr.bf16.mxu0 0
      %581 = vmatpush2.bf16.msra.mxu0 0
      %582 = vmatprep.subr.bf16.mxu0 0
      %583 = vmatpush2.bf16.msra.mxu0 0
      %584 = vmatprep.subr.bf16.mxu0 0
      %585 = vmatpush2.bf16.msra.mxu0 0
      %586 = vmatprep.subr.bf16.mxu0 0
      %587 = vmatpush2.bf16.msra.mxu0 0
      %588 = vmatprep.subr.bf16.mxu0 0
      %589 = vmatpush2.bf16.msra.mxu0 0
      %590 = vmatprep.subr.bf16.mxu0 0
      %591 = vmatpush2.bf16.msra.mxu0 0
      %592 = vmatprep.mubr.bf16.mxu0 0
      %593 = vmatmul.mubr.bf16.gmra.mxu0 %v558
      %v594 = vpop.f32.mrf.mxu0
      %v595 = vadd.f32 0.0, %v594
      %v596 = vpop.f32.mrf.mxu0
      %v597 = vpop.f32.mrf.mxu0
      %v598 = vpop.f32.mrf.mxu0
      %599 = vdwg.mxu0
      %v600 = vrcp.pop %v552
      %v601 = vmul.f32 %v595, %v600
      %603 = vrot.lane.b32.xlu0 %v385, 32
      %v604 = vpop.permute.xlu0 %603
      %607 = vrot.lane.b32.xlu0 %v493, 64
      %v608 = vpop.permute.xlu0 %607
      %611 = vrot.lane.b32.xlu0 %v601, 96
      %v612 = vpop.permute.xlu0 %611
      %v614 = vsel %vm168, %v274, %v604
      %vm615 = vcmask 523264
      %v616 = vsel %vm615, %v614, %v608
      %vm617 = vcmask 785408
      %v618 = vsel %vm617, %v616, %v612
      %v619 = vpack.c.bf16 %v618, %v618
      %620 = vst [vmem:[%s158] sm:$0xf] %v619
      %p621 = scmp.lt.s32.totalorder %s13, 1
      %s622 = scalar_select %p621, %s13, 1
      %s623 = smul.addr %s622, 4
      %s624 = scalar_lea.vmem %s2, %s623
      // Predicated region
      $region29: #{transformer_forward.14} parent=27 // pred_check
        %p625 = pneg %p83
      $region30: #{transformer_forward.14} parent=27 // pred_check_branch
        %627 = sbr.rel (%p625) target = $region32
      $region31: #{transformer_forward.14} parent=27 // pred_region
        _
      $region32: #{transformer_forward.14} parent=27 // pred_fallthru
        _
    $region28: #{transformer_forward.14} parent=5 // pred_fallthru
      _
    %p628 = scmp.le.s32.totalorder 2, %s8
    // Predicated region
    $region33: #{transformer_forward.14} parent=5 // pred_check
      %p629 = pneg %p628
    $region34: #{transformer_forward.14} parent=5 // pred_check_branch
      %631 = sbr.rel (%p629) target = $region36
    $region35: #{transformer_forward.14} parent=5 // pred_region
      %s632 = ssub.s32 %s8, 2
      // Predicated region
      $region37: #{transformer_forward.14} parent=35 // pred_check
        %p633 = pneg %p89
      $region38: #{transformer_forward.14} parent=35 // pred_check_branch
        %635 = sbr.rel (%p633) target = $region40
      $region39: #{transformer_forward.14} parent=35 // pred_region
        %p636 = scmp.lt.s32.totalorder %s14, 1
        %s637 = scalar_select %p636, %s14, 1
        %s638 = smul.addr %s637, 4
        %s639 = scalar_lea.vmem %s2, %s638
      $region40: #{transformer_forward.14} parent=35 // pred_fallthru
        _
    $region36: #{transformer_forward.14} parent=5 // pred_fallthru
      _
  $region6: #{transformer_forward.14} parent=0 // loop_footer
    %s12 = sadd.s32 1, %s8
  $region7: #{transformer_forward.14} parent=0 // loop_footer_branch
    %7 = sbr.rel target = $region3
  $region8: #{transformer_forward.14} parent=0 // loop_exit
    _

// kernel: transformer_forward.13
$region0: #{transformer_forward.13}
  #allocation0 [shape = 'u32[]', space=smem, size = 0x4, offset = 0x4, fixed_abs, tag = 'smem constant byte address 0x4 - core index']
  #allocation1 [shape = 'u32[144,128]{1,0:T(1,128)}', space=vmem, size = 0x12000, scoped, tag = 'internal scratch']
  %s0 = inlined_call_operand.vmem [shape: f32[32,128], index: 0, kind: input, shape index: {}]
  %s1 = inlined_call_operand.vmem [shape: f32[1,128], index: 1, kind: input, shape index: {}]
  %s2 = inlined_call_operand.vmem [shape: f32[1,128], index: 2, kind: input, shape index: {}]
  %s3 = inlined_call_operand.vmem [shape: bf16[128,256], index: 3, kind: input, shape index: {}]
  %s4 = inlined_call_operand.vmem [shape: bf16[32,256], index: 4, kind: output, shape index: {}]
  %s5 = sld [smem:[#allocation0]]
  $region26: #{transformer_forward.13} parent=0
    _
  %s7 = ssub.s32 1, %s5
  %s8 = scalar_select 0, %s7, %s5
  // Predicated region
  $region2: #{transformer_forward.13} parent=0 // pred_check
    _
  $region3: #{transformer_forward.13} parent=0 // pred_check_branch
    %10 = sbr.rel (0) target = $region5
  $region4: #{transformer_forward.13} parent=0 // pred_region
    _
  $region5: #{transformer_forward.13} parent=0 // pred_fallthru
    _
  // Predicated region
  $region6: #{transformer_forward.13} parent=0 // pred_check
    _
  $region7: #{transformer_forward.13} parent=0 // pred_check_branch
    %12 = sbr.rel (0) target = $region9
  $region8: #{transformer_forward.13} parent=0 // pred_region
    _
  $region9: #{transformer_forward.13} parent=0 // pred_fallthru
    _
  // Predicated region
  $region10: #{transformer_forward.13} parent=0 // pred_check
    _
  $region11: #{transformer_forward.13} parent=0 // pred_check_branch
    %14 = sbr.rel (0) target = $region13
  $region12: #{transformer_forward.13} parent=0 // pred_region
    _
  $region13: #{transformer_forward.13} parent=0 // pred_fallthru
    _
  // Predicated region
  $region14: #{transformer_forward.13} parent=0 // pred_check
    _
  $region15: #{transformer_forward.13} parent=0 // pred_check_branch
    %16 = sbr.rel (0) target = $region17
  $region16: #{transformer_forward.13} parent=0 // pred_region
    _
  $region17: #{transformer_forward.13} parent=0 // pred_fallthru
    _
  %v18 = vld [vmem:[%s0] sm:$0xff]
  %v19 = vld [vmem:[%s0 + $0x8] sm:$0xff]
  %v20 = vld [vmem:[%s0 + $0x10] sm:$0xff]
  %v21 = vld [vmem:[%s0 + $0x18] sm:$0xff]
  %22 = vadd.xlane.f32.xlu0 %v18
  %v23 = vpop.xlane.xlu0 %22
  %24 = vadd.xlane.f32.xlu0 %v19
  %v25 = vpop.xlane.xlu0 %24
  %26 = vadd.xlane.f32.xlu0 %v20
  %v27 = vpop.xlane.xlu0 %26
  %28 = vadd.xlane.f32.xlu0 %v21
  %v29 = vpop.xlane.xlu0 %28
  %v30 = vmul.f32 %v23, 0.0078125
  %v31 = vmul.f32 %v25, 0.0078125
  %v32 = vmul.f32 %v27, 0.0078125
  %v33 = vmul.f32 %v29, 0.0078125
  %v34 = vsub.f32 %v18, %v30
  %v35 = vsub.f32 %v19, %v31
  %v36 = vsub.f32 %v20, %v32
  %v37 = vsub.f32 %v21, %v33
  %v38 = vmul.f32 %v34, %v34
  %v39 = vmul.f32 %v35, %v35
  %v40 = vmul.f32 %v36, %v36
  %v41 = vmul.f32 %v37, %v37
  %42 = vadd.xlane.f32.xlu0 %v38
  %v43 = vpop.xlane.xlu0 %42
  %44 = vadd.xlane.f32.xlu0 %v39
  %v45 = vpop.xlane.xlu0 %44
  %46 = vadd.xlane.f32.xlu0 %v40
  %v47 = vpop.xlane.xlu0 %46
  %48 = vadd.xlane.f32.xlu0 %v41
  %v49 = vpop.xlane.xlu0 %48
  %v50 = vmul.f32 %v43, 0.0078125
  %v51 = vmul.f32 %v45, 0.0078125
  %v52 = vmul.f32 %v47, 0.0078125
  %v53 = vmul.f32 %v49, 0.0078125
  %v54 = vadd.f32 %v50, 1e-05
  %v55 = vadd.f32 %v51, 1e-05
  %v56 = vadd.f32 %v52, 1e-05
  %v57 = vadd.f32 %v53, 1e-05
  %v58 = vrsqrt.pop %v54
  %v59 = vrsqrt.pop %v55
  %v60 = vrsqrt.pop %v56
  %v61 = vrsqrt.pop %v57
  %v62 = vmul.f32 %v34, %v58
  %v63 = vmul.f32 %v35, %v59
  %v64 = vmul.f32 %v36, %v60
  %v65 = vmul.f32 %v37, %v61
  %v66 = vld [vmem:[%s1] sm:$0x1]
  %v68 = vlaneseq
  %v69 = vshrl.u32 %v68, 7
  %v70 = vsub.s32 0, %v69
  %v71 = vrot.slane %v66, %v70
  %v73 = vmul.f32 %v62, %v71
  %v74 = vmul.f32 %v63, %v71
  %v75 = vmul.f32 %v64, %v71
  %v76 = vmul.f32 %v65, %v71
  %v77 = vld [vmem:[%s2] sm:$0x1]
  %v79 = vlaneseq
  %v80 = vshrl.u32 %v79, 7
  %v81 = vsub.s32 0, %v80
  %v82 = vrot.slane %v77, %v81
  %v84 = vadd.f32 %v73, %v82
  %v85 = vadd.f32 %v74, %v82
  %v86 = vadd.f32 %v75, %v82
  %v87 = vadd.f32 %v76, %v82
  %v88 = vpack.c.bf16 %v85, %v84
  %v89 = vpack.c.bf16 %v87, %v86
  %v90 = vld [vmem:[%s3] sm:$0xff]
  %v91 = vld [vmem:[%s3 + $0x8] sm:$0xff]
  %v92 = vld [vmem:[%s3 + $0x10] sm:$0xff]
  %v93 = vld [vmem:[%s3 + $0x18] sm:$0xff]
  %v94 = vld [vmem:[%s3 + $0x20] sm:$0xff]
  %v95 = vld [vmem:[%s3 + $0x28] sm:$0xff]
  %v96 = vld [vmem:[%s3 + $0x30] sm:$0xff]
  %v97 = vld [vmem:[%s3 + $0x38] sm:$0xff]
  %v98 = vld [vmem:[%s3 + $0x40] sm:$0xff]
  %v99 = vld [vmem:[%s3 + $0x48] sm:$0xff]
  %v100 = vld [vmem:[%s3 + $0x50] sm:$0xff]
  %v101 = vld [vmem:[%s3 + $0x58] sm:$0xff]
  %v102 = vld [vmem:[%s3 + $0x60] sm:$0xff]
  %v103 = vld [vmem:[%s3 + $0x68] sm:$0xff]
  %v104 = vld [vmem:[%s3 + $0x70] sm:$0xff]
  %v105 = vld [vmem:[%s3 + $0x78] sm:$0xff]
  %v122 = vunpack.c.l.b16 %v90
  %v123 = vunpack.c.h.b16 %v90
  %v124 = vunpack.c.l.b16 %v91
  %v125 = vunpack.c.h.b16 %v91
  %v126 = vunpack.c.l.b16 %v92
  %v127 = vunpack.c.h.b16 %v92
  %v128 = vunpack.c.l.b16 %v93
  %v129 = vunpack.c.h.b16 %v93
  %v130 = vunpack.c.l.b16 %v94
  %v131 = vunpack.c.h.b16 %v94
  %v132 = vunpack.c.l.b16 %v95
  %v133 = vunpack.c.h.b16 %v95
  %v134 = vunpack.c.l.b16 %v96
  %v135 = vunpack.c.h.b16 %v96
  %v136 = vunpack.c.l.b16 %v97
  %v137 = vunpack.c.h.b16 %v97
  %v138 = vunpack.c.l.b16 %v98
  %v139 = vunpack.c.h.b16 %v98
  %v140 = vunpack.c.l.b16 %v99
  %v141 = vunpack.c.h.b16 %v99
  %v142 = vunpack.c.l.b16 %v100
  %v143 = vunpack.c.h.b16 %v100
  %v144 = vunpack.c.l.b16 %v101
  %v145 = vunpack.c.h.b16 %v101
  %v146 = vunpack.c.l.b16 %v102
  %v147 = vunpack.c.h.b16 %v102
  %v148 = vunpack.c.l.b16 %v103
  %v149 = vunpack.c.h.b16 %v103
  %v150 = vunpack.c.l.b16 %v104
  %v151 = vunpack.c.h.b16 %v104
  %v152 = vunpack.c.l.b16 %v105
  %v153 = vunpack.c.h.b16 %v105
  %v154 = vpack.c.b16 %v124, %v122
  %v155 = vpack.c.b16 %v125, %v123
  %v156 = vpack.c.b16 %v128, %v126
  %v157 = vpack.c.b16 %v129, %v127
  %v158 = vpack.c.b16 %v132, %v130
  %v159 = vpack.c.b16 %v133, %v131
  %v160 = vpack.c.b16 %v136, %v134
  %v161 = vpack.c.b16 %v137, %v135
  %v162 = vpack.c.b16 %v140, %v138
  %v163 = vpack.c.b16 %v141, %v139
  %v164 = vpack.c.b16 %v144, %v142
  %v165 = vpack.c.b16 %v145, %v143
  %v166 = vpack.c.b16 %v148, %v146
  %v167 = vpack.c.b16 %v149, %v147
  %v168 = vpack.c.b16 %v152, %v150
  %v169 = vpack.c.b16 %v153, %v151
  %186 = vmatprep.subr.bf16.mxu0 %v169
  %187 = vmatpush1.bf16.msra.mxu0 %v168
  %188 = vmatprep.subr.bf16.mxu0 %v167
  %189 = vmatpush1.bf16.msra.mxu0 %v166
  %190 = vmatprep.subr.bf16.mxu0 %v165
  %191 = vmatpush1.bf16.msra.mxu0 %v164
  %192 = vmatprep.subr.bf16.mxu0 %v163
  %193 = vmatpush1.bf16.msra.mxu0 %v162
  %194 = vmatprep.subr.bf16.mxu0 %v161
  %195 = vmatpush1.bf16.msra.mxu0 %v160
  %196 = vmatprep.subr.bf16.mxu0 %v159
  %197 = vmatpush1.bf16.msra.mxu0 %v158
  %198 = vmatprep.subr.bf16.mxu0 %v157
  %199 = vmatpush1.bf16.msra.mxu0 %v156
  %200 = vmatprep.subr.bf16.mxu0 %v155
  %201 = vmatpush1.bf16.msra.mxu0 %v154
  %202 = vmatprep.subr.bf16.mxu0 0
  %203 = vmatpush2.bf16.msra.mxu0 0
  %204 = vmatprep.subr.bf16.mxu0 0
  %205 = vmatpush2.bf16.msra.mxu0 0
  %206 = vmatprep.subr.bf16.mxu0 0
  %207 = vmatpush2.bf16.msra.mxu0 0
  %208 = vmatprep.subr.bf16.mxu0 0
  %209 = vmatpush2.bf16.msra.mxu0 0
  %210 = vmatprep.subr.bf16.mxu0 0
  %211 = vmatpush2.bf16.msra.mxu0 0
  %212 = vmatprep.subr.bf16.mxu0 0
  %213 = vmatpush2.bf16.msra.mxu0 0
  %214 = vmatprep.subr.bf16.mxu0 0
  %215 = vmatpush2.bf16.msra.mxu0 0
  %216 = vmatprep.subr.bf16.mxu0 0
  %217 = vmatpush2.bf16.msra.mxu0 0
  %218 = vmatprep.mubr.bf16.mxu0 0
  %219 = vmatmul.mubr.bf16.gmra.mxu0 %v88
  %v220 = vpop.f32.mrf.mxu0
  %v221 = vadd.f32 0.0, %v220
  %v222 = vpop.f32.mrf.mxu0
  %v223 = vadd.f32 0.0, %v222
  %v224 = vpop.f32.mrf.mxu0
  %v225 = vadd.f32 0.0, %v224
  %v226 = vpop.f32.mrf.mxu0
  %v227 = vadd.f32 0.0, %v226
  %228 = vmatprep.mubr.bf16.mxu0 0
  %229 = vmatmul.mubr.bf16.gmra.mxu0 %v89
  %v230 = vpop.f32.mrf.mxu0
  %v231 = vadd.f32 0.0, %v230
  %v232 = vpop.f32.mrf.mxu0
  %v233 = vadd.f32 0.0, %v232
  %v234 = vpop.f32.mrf.mxu0
  %v235 = vadd.f32 0.0, %v234
  %v236 = vpop.f32.mrf.mxu0
  %v237 = vadd.f32 0.0, %v236
  %238 = vdwg.mxu0
  %v239 = vpack.c.bf16 %v225, %v221
  %v240 = vpack.c.bf16 %v227, %v223
  %v241 = vpack.c.bf16 %v235, %v231
  %v242 = vpack.c.bf16 %v237, %v233
  %v247 = vunpack.c.l.b16 %v239
  %v248 = vunpack.c.l.b16 %v240
  %v249 = vunpack.c.h.b16 %v239
  %v250 = vunpack.c.h.b16 %v240
  %v251 = vunpack.c.l.b16 %v241
  %v252 = vunpack.c.l.b16 %v242
  %v253 = vunpack.c.h.b16 %v241
  %v254 = vunpack.c.h.b16 %v242
  %v255 = vpack.c.b16 %v248, %v247
  %v256 = vpack.c.b16 %v250, %v249
  %v257 = vpack.c.b16 %v252, %v251
  %v258 = vpack.c.b16 %v254, %v253
  %263 = vst [vmem:[%s4] sm:$0xff] %v255
  %264 = vst [vmem:[%s4 + $0x8] sm:$0xff] %v256
  %265 = vst [vmem:[%s4 + $0x10] sm:$0xff] %v257
  %266 = vst [vmem:[%s4 + $0x18] sm:$0xff] %v258
  // Predicated region
  $region18: #{transformer_forward.13} parent=0 // pred_check
    _
  $region19: #{transformer_forward.13} parent=0 // pred_check_branch
    %268 = sbr.rel (0) target = $region21
  $region20: #{transformer_forward.13} parent=0 // pred_region
    _
  $region21: #{transformer_forward.13} parent=0 // pred_fallthru
    _
  // Predicated region
  $region22: #{transformer_forward.13} parent=0 // pred_check
    _
  $region23: #{transformer_forward.13} parent=0 // pred_check_branch
    %270 = sbr.rel (0) target = $region25
  $region24: #{transformer_forward.13} parent=0 // pred_region
    _
  $region25: #{transformer_forward.13} parent=0 // pred_fallthru
    _

// kernel: transformer_forward.15
$region0: #{transformer_forward.15}
  #allocation0 [shape = 'u32[]', space=smem, size = 0x4, offset = 0x4, fixed_abs, tag = 'smem constant byte address 0x4 - core index']
  #allocation1 [shape = 'u32[144,128]{1,0:T(1,128)}', space=vmem, size = 0x12000, scoped, tag = 'internal scratch']
  %s0 = inlined_call_operand.vmem [shape: bf16[16,128], index: 0, kind: input, shape index: {}]
  %s1 = inlined_call_operand.vmem [shape: bf16[128,128], index: 1, kind: input, shape index: {}]
  %s2 = inlined_call_operand.vmem [shape: f32[1,128], index: 2, kind: input, shape index: {}]
  %s3 = inlined_call_operand.vmem [shape: f32[16,128], index: 3, kind: input, shape index: {}]
  %s4 = inlined_call_operand.vmem [shape: f32[16,128], index: 4, kind: output, shape index: {}]
  %s5 = sld [smem:[#allocation0]]
  $region26: #{transformer_forward.15} parent=0
    _
  %s7 = ssub.s32 1, %s5
  %s8 = scalar_select 0, %s7, %s5
  // Predicated region
  $region2: #{transformer_forward.15} parent=0 // pred_check
    _
  $region3: #{transformer_forward.15} parent=0 // pred_check_branch
    %10 = sbr.rel (0) target = $region5
  $region4: #{transformer_forward.15} parent=0 // pred_region
    _
  $region5: #{transformer_forward.15} parent=0 // pred_fallthru
    _
  // Predicated region
  $region6: #{transformer_forward.15} parent=0 // pred_check
    _
  $region7: #{transformer_forward.15} parent=0 // pred_check_branch
    %12 = sbr.rel (0) target = $region9
  $region8: #{transformer_forward.15} parent=0 // pred_region
    _
  $region9: #{transformer_forward.15} parent=0 // pred_fallthru
    _
  // Predicated region
  $region10: #{transformer_forward.15} parent=0 // pred_check
    _
  $region11: #{transformer_forward.15} parent=0 // pred_check_branch
    %14 = sbr.rel (0) target = $region13
  $region12: #{transformer_forward.15} parent=0 // pred_region
    _
  $region13: #{transformer_forward.15} parent=0 // pred_fallthru
    _
  // Predicated region
  $region14: #{transformer_forward.15} parent=0 // pred_check
    _
  $region15: #{transformer_forward.15} parent=0 // pred_check_branch
    %16 = sbr.rel (0) target = $region17
  $region16: #{transformer_forward.15} parent=0 // pred_region
    _
  $region17: #{transformer_forward.15} parent=0 // pred_fallthru
    _
  %v18 = vld [vmem:[%s0] sm:$0xf]
  %v19 = vld [vmem:[%s0 + $0x4] sm:$0xf]
  %v20 = vld [vmem:[%s1] sm:$0xf]
  %v21 = vld [vmem:[%s1 + $0x4] sm:$0xf]
  %v22 = vld [vmem:[%s1 + $0x8] sm:$0xf]
  %v23 = vld [vmem:[%s1 + $0xc] sm:$0xf]
  %v24 = vld [vmem:[%s1 + $0x10] sm:$0xf]
  %v25 = vld [vmem:[%s1 + $0x14] sm:$0xf]
  %v26 = vld [vmem:[%s1 + $0x18] sm:$0xf]
  %v27 = vld [vmem:[%s1 + $0x1c] sm:$0xf]
  %v28 = vld [vmem:[%s1 + $0x20] sm:$0xf]
  %v29 = vld [vmem:[%s1 + $0x24] sm:$0xf]
  %v30 = vld [vmem:[%s1 + $0x28] sm:$0xf]
  %v31 = vld [vmem:[%s1 + $0x2c] sm:$0xf]
  %v32 = vld [vmem:[%s1 + $0x30] sm:$0xf]
  %v33 = vld [vmem:[%s1 + $0x34] sm:$0xf]
  %v34 = vld [vmem:[%s1 + $0x38] sm:$0xf]
  %v35 = vld [vmem:[%s1 + $0x3c] sm:$0xf]
  %v36 = vld [vmem:[%s2] sm:$0x1]
  %v38 = vlaneseq
  %v39 = vshrl.u32 %v38, 7
  %v40 = vsub.s32 0, %v39
  %v41 = vrot.slane %v36, %v40
  %v45 = vunpack.c.l.b16 %v18
  %v46 = vunpack.c.l.b16 %v19
  %v47 = vpack.c.b16 %v46, %v45
  %v65 = vunpack.c.l.b16 %v20
  %v66 = vunpack.c.l.b16 %v21
  %v67 = vunpack.c.l.b16 %v22
  %v68 = vunpack.c.l.b16 %v23
  %v69 = vunpack.c.l.b16 %v24
  %v70 = vunpack.c.l.b16 %v25
  %v71 = vunpack.c.l.b16 %v26
  %v72 = vunpack.c.l.b16 %v27
  %v73 = vunpack.c.l.b16 %v28
  %v74 = vunpack.c.l.b16 %v29
  %v75 = vunpack.c.l.b16 %v30
  %v76 = vunpack.c.l.b16 %v31
  %v77 = vunpack.c.l.b16 %v32
  %v78 = vunpack.c.l.b16 %v33
  %v79 = vunpack.c.l.b16 %v34
  %v80 = vunpack.c.l.b16 %v35
  %v81 = vpack.c.b16 %v66, %v65
  %v82 = vpack.c.b16 %v68, %v67
  %v83 = vpack.c.b16 %v70, %v69
  %v84 = vpack.c.b16 %v72, %v71
  %v85 = vpack.c.b16 %v74, %v73
  %v86 = vpack.c.b16 %v76, %v75
  %v87 = vpack.c.b16 %v78, %v77
  %v88 = vpack.c.b16 %v80, %v79
  %97 = vmatprep.subr.bf16.mxu0 0
  %98 = vmatpush1.bf16.msra.mxu0 %v88
  %99 = vmatprep.subr.bf16.mxu0 0
  %100 = vmatpush1.bf16.msra.mxu0 %v87
  %101 = vmatprep.subr.bf16.mxu0 0
  %102 = vmatpush1.bf16.msra.mxu0 %v86
  %103 = vmatprep.subr.bf16.mxu0 0
  %104 = vmatpush1.bf16.msra.mxu0 %v85
  %105 = vmatprep.subr.bf16.mxu0 0
  %106 = vmatpush1.bf16.msra.mxu0 %v84
  %107 = vmatprep.subr.bf16.mxu0 0
  %108 = vmatpush1.bf16.msra.mxu0 %v83
  %109 = vmatprep.subr.bf16.mxu0 0
  %110 = vmatpush1.bf16.msra.mxu0 %v82
  %111 = vmatprep.subr.bf16.mxu0 0
  %112 = vmatpush1.bf16.msra.mxu0 %v81
  %113 = vmatprep.subr.bf16.mxu0 0
  %114 = vmatpush2.bf16.msra.mxu0 0
  %115 = vmatprep.subr.bf16.mxu0 0
  %116 = vmatpush2.bf16.msra.mxu0 0
  %117 = vmatprep.subr.bf16.mxu0 0
  %118 = vmatpush2.bf16.msra.mxu0 0
  %119 = vmatprep.subr.bf16.mxu0 0
  %120 = vmatpush2.bf16.msra.mxu0 0
  %121 = vmatprep.subr.bf16.mxu0 0
  %122 = vmatpush2.bf16.msra.mxu0 0
  %123 = vmatprep.subr.bf16.mxu0 0
  %124 = vmatpush2.bf16.msra.mxu0 0
  %125 = vmatprep.subr.bf16.mxu0 0
  %126 = vmatpush2.bf16.msra.mxu0 0
  %127 = vmatprep.subr.bf16.mxu0 0
  %128 = vmatpush2.bf16.msra.mxu0 0
  %129 = vmatprep.mubr.bf16.mxu0 0
  %130 = vmatmul.mubr.bf16.gmra.mxu0 %v47
  %v131 = vpop.f32.mrf.mxu0
  %v132 = vadd.f32 %v41, %v131
  %v133 = vpop.f32.mrf.mxu0
  %v134 = vpop.f32.mrf.mxu0
  %v135 = vadd.f32 %v41, %v134
  %v136 = vpop.f32.mrf.mxu0
  %137 = vdwg.mxu0
  %v138 = vld [vmem:[%s3] sm:$0xff]
  %v139 = vld [vmem:[%s3 + $0x8] sm:$0xff]
  %v140 = vadd.f32 %v132, %v138
  %v141 = vadd.f32 %v135, %v139
  %142 = vst [vmem:[%s4] sm:$0xff] %v140
  %143 = vst [vmem:[%s4 + $0x8] sm:$0xff] %v141
  // Predicated region
  $region18: #{transformer_forward.15} parent=0 // pred_check
    _
  $region19: #{transformer_forward.15} parent=0 // pred_check_branch
    %145 = sbr.rel (0) target = $region21
  $region20: #{transformer_forward.15} parent=0 // pred_region
    _
  $region21: #{transformer_forward.15} parent=0 // pred_fallthru
    _
  // Predicated region
  $region22: #{transformer_forward.15} parent=0 // pred_check
    _
  $region23: #{transformer_forward.15} parent=0 // pred_check_branch
    %147 = sbr.rel (0) target = $region25
  $region24: #{transformer_forward.15} parent=0 // pred_region
    _
  $region25: #{transformer_forward.15} parent=0 // pred_fallthru
    _

// kernel: transformer_forward.17
$region0: #{transformer_forward.17}
  #allocation0 [shape = 'u32[]', space=smem, size = 0x4, offset = 0x4, fixed_abs, tag = 'smem constant byte address 0x4 - core index']
  #allocation1 [shape = 'u32[144,128]{1,0:T(1,128)}', space=vmem, size = 0x12000, scoped, tag = 'internal scratch']
  %s0 = inlined_call_operand.vmem [shape: bf16[16,256], index: 0, kind: input, shape index: {}]
  %s1 = inlined_call_operand.vmem [shape: bf16[256,128], index: 1, kind: input, shape index: {}]
  %s2 = inlined_call_operand.vmem [shape: f32[1,128], index: 2, kind: input, shape index: {}]
  %s3 = inlined_call_operand.vmem [shape: f32[16,128], index: 3, kind: input, shape index: {}]
  %s4 = inlined_call_operand.vmem [shape: f32[16,128], index: 4, kind: output, shape index: {}]
  %s5 = sld [smem:[#allocation0]]
  $region26: #{transformer_forward.17} parent=0
    _
  %s7 = ssub.s32 1, %s5
  %s8 = scalar_select 0, %s7, %s5
  // Predicated region
  $region2: #{transformer_forward.17} parent=0 // pred_check
    _
  $region3: #{transformer_forward.17} parent=0 // pred_check_branch
    %10 = sbr.rel (0) target = $region5
  $region4: #{transformer_forward.17} parent=0 // pred_region
    _
  $region5: #{transformer_forward.17} parent=0 // pred_fallthru
    _
  // Predicated region
  $region6: #{transformer_forward.17} parent=0 // pred_check
    _
  $region7: #{transformer_forward.17} parent=0 // pred_check_branch
    %12 = sbr.rel (0) target = $region9
  $region8: #{transformer_forward.17} parent=0 // pred_region
    _
  $region9: #{transformer_forward.17} parent=0 // pred_fallthru
    _
  // Predicated region
  $region10: #{transformer_forward.17} parent=0 // pred_check
    _
  $region11: #{transformer_forward.17} parent=0 // pred_check_branch
    %14 = sbr.rel (0) target = $region13
  $region12: #{transformer_forward.17} parent=0 // pred_region
    _
  $region13: #{transformer_forward.17} parent=0 // pred_fallthru
    _
  // Predicated region
  $region14: #{transformer_forward.17} parent=0 // pred_check
    _
  $region15: #{transformer_forward.17} parent=0 // pred_check_branch
    %16 = sbr.rel (0) target = $region17
  $region16: #{transformer_forward.17} parent=0 // pred_region
    _
  $region17: #{transformer_forward.17} parent=0 // pred_fallthru
    _
  %v18 = vld [vmem:[%s0] sm:$0xff]
  %v19 = vld [vmem:[%s0 + $0x8] sm:$0xff]
  %v20 = vld [vmem:[%s1] sm:$0xf]
  %v21 = vld [vmem:[%s1 + $0x4] sm:$0xf]
  %v22 = vld [vmem:[%s1 + $0x8] sm:$0xf]
  %v23 = vld [vmem:[%s1 + $0xc] sm:$0xf]
  %v24 = vld [vmem:[%s1 + $0x10] sm:$0xf]
  %v25 = vld [vmem:[%s1 + $0x14] sm:$0xf]
  %v26 = vld [vmem:[%s1 + $0x18] sm:$0xf]
  %v27 = vld [vmem:[%s1 + $0x1c] sm:$0xf]
  %v28 = vld [vmem:[%s1 + $0x20] sm:$0xf]
  %v29 = vld [vmem:[%s1 + $0x24] sm:$0xf]
  %v30 = vld [vmem:[%s1 + $0x28] sm:$0xf]
  %v31 = vld [vmem:[%s1 + $0x2c] sm:$0xf]
  %v32 = vld [vmem:[%s1 + $0x30] sm:$0xf]
  %v33 = vld [vmem:[%s1 + $0x34] sm:$0xf]
  %v34 = vld [vmem:[%s1 + $0x38] sm:$0xf]
  %v35 = vld [vmem:[%s1 + $0x3c] sm:$0xf]
  %v36 = vld [vmem:[%s1 + $0x40] sm:$0xf]
  %v37 = vld [vmem:[%s1 + $0x44] sm:$0xf]
  %v38 = vld [vmem:[%s1 + $0x48] sm:$0xf]
  %v39 = vld [vmem:[%s1 + $0x4c] sm:$0xf]
  %v40 = vld [vmem:[%s1 + $0x50] sm:$0xf]
  %v41 = vld [vmem:[%s1 + $0x54] sm:$0xf]
  %v42 = vld [vmem:[%s1 + $0x58] sm:$0xf]
  %v43 = vld [vmem:[%s1 + $0x5c] sm:$0xf]
  %v44 = vld [vmem:[%s1 + $0x60] sm:$0xf]
  %v45 = vld [vmem:[%s1 + $0x64] sm:$0xf]
  %v46 = vld [vmem:[%s1 + $0x68] sm:$0xf]
  %v47 = vld [vmem:[%s1 + $0x6c] sm:$0xf]
  %v48 = vld [vmem:[%s1 + $0x70] sm:$0xf]
  %v49 = vld [vmem:[%s1 + $0x74] sm:$0xf]
  %v50 = vld [vmem:[%s1 + $0x78] sm:$0xf]
  %v51 = vld [vmem:[%s1 + $0x7c] sm:$0xf]
  %v52 = vld [vmem:[%s2] sm:$0x1]
  %v54 = vlaneseq
  %v55 = vshrl.u32 %v54, 7
  %v56 = vsub.s32 0, %v55
  %v57 = vrot.slane %v52, %v56
  %v61 = vunpack.c.l.b16 %v18
  %v62 = vunpack.c.h.b16 %v18
  %v63 = vunpack.c.l.b16 %v19
  %v64 = vunpack.c.h.b16 %v19
  %v65 = vpack.c.b16 %v63, %v61
  %v66 = vpack.c.b16 %v64, %v62
  %v101 = vunpack.c.l.b16 %v20
  %v102 = vunpack.c.l.b16 %v21
  %v103 = vunpack.c.l.b16 %v22
  %v104 = vunpack.c.l.b16 %v23
  %v105 = vunpack.c.l.b16 %v24
  %v106 = vunpack.c.l.b16 %v25
  %v107 = vunpack.c.l.b16 %v26
  %v108 = vunpack.c.l.b16 %v27
  %v109 = vunpack.c.l.b16 %v28
  %v110 = vunpack.c.l.b16 %v29
  %v111 = vunpack.c.l.b16 %v30
  %v112 = vunpack.c.l.b16 %v31
  %v113 = vunpack.c.l.b16 %v32
  %v114 = vunpack.c.l.b16 %v33
  %v115 = vunpack.c.l.b16 %v34
  %v116 = vunpack.c.l.b16 %v35
  %v117 = vunpack.c.l.b16 %v36
  %v118 = vunpack.c.l.b16 %v37
  %v119 = vunpack.c.l.b16 %v38
  %v120 = vunpack.c.l.b16 %v39
  %v121 = vunpack.c.l.b16 %v40
  %v122 = vunpack.c.l.b16 %v41
  %v123 = vunpack.c.l.b16 %v42
  %v124 = vunpack.c.l.b16 %v43
  %v125 = vunpack.c.l.b16 %v44
  %v126 = vunpack.c.l.b16 %v45
  %v127 = vunpack.c.l.b16 %v46
  %v128 = vunpack.c.l.b16 %v47
  %v129 = vunpack.c.l.b16 %v48
  %v130 = vunpack.c.l.b16 %v49
  %v131 = vunpack.c.l.b16 %v50
  %v132 = vunpack.c.l.b16 %v51
  %v133 = vpack.c.b16 %v102, %v101
  %v134 = vpack.c.b16 %v104, %v103
  %v135 = vpack.c.b16 %v106, %v105
  %v136 = vpack.c.b16 %v108, %v107
  %v137 = vpack.c.b16 %v110, %v109
  %v138 = vpack.c.b16 %v112, %v111
  %v139 = vpack.c.b16 %v114, %v113
  %v140 = vpack.c.b16 %v116, %v115
  %v141 = vpack.c.b16 %v118, %v117
  %v142 = vpack.c.b16 %v120, %v119
  %v143 = vpack.c.b16 %v122, %v121
  %v144 = vpack.c.b16 %v124, %v123
  %v145 = vpack.c.b16 %v126, %v125
  %v146 = vpack.c.b16 %v128, %v127
  %v147 = vpack.c.b16 %v130, %v129
  %v148 = vpack.c.b16 %v132, %v131
  %165 = vmatprep.subr.bf16.mxu0 0
  %166 = vmatpush1.bf16.msra.mxu0 %v140
  %167 = vmatprep.subr.bf16.mxu0 0
  %168 = vmatpush1.bf16.msra.mxu0 %v139
  %169 = vmatprep.subr.bf16.mxu0 0
  %170 = vmatpush1.bf16.msra.mxu0 %v138
  %171 = vmatprep.subr.bf16.mxu0 0
  %172 = vmatpush1.bf16.msra.mxu0 %v137
  %173 = vmatprep.subr.bf16.mxu0 0
  %174 = vmatpush1.bf16.msra.mxu0 %v136
  %175 = vmatprep.subr.bf16.mxu0 0
  %176 = vmatpush1.bf16.msra.mxu0 %v135
  %177 = vmatprep.subr.bf16.mxu0 0
  %178 = vmatpush1.bf16.msra.mxu0 %v134
  %179 = vmatprep.subr.bf16.mxu0 0
  %180 = vmatpush1.bf16.msra.mxu0 %v133
  %181 = vmatprep.subr.bf16.mxu0 0
  %182 = vmatpush2.bf16.msra.mxu0 %v148
  %183 = vmatprep.subr.bf16.mxu0 0
  %184 = vmatpush2.bf16.msra.mxu0 %v147
  %185 = vmatprep.subr.bf16.mxu0 0
  %186 = vmatpush2.bf16.msra.mxu0 %v146
  %187 = vmatprep.subr.bf16.mxu0 0
  %188 = vmatpush2.bf16.msra.mxu0 %v145
  %189 = vmatprep.subr.bf16.mxu0 0
  %190 = vmatpush2.bf16.msra.mxu0 %v144
  %191 = vmatprep.subr.bf16.mxu0 0
  %192 = vmatpush2.bf16.msra.mxu0 %v143
  %193 = vmatprep.subr.bf16.mxu0 0
  %194 = vmatpush2.bf16.msra.mxu0 %v142
  %195 = vmatprep.subr.bf16.mxu0 0
  %196 = vmatpush2.bf16.msra.mxu0 %v141
  %197 = vmatprep.mubr.bf16.mxu0 %v66
  %198 = vmatmul.mubr.bf16.gmra.mxu0 %v65
  %v199 = vpop.f32.mrf.mxu0
  %v200 = vadd.f32 %v57, %v199
  %v201 = vpop.f32.mrf.mxu0
  %v202 = vpop.f32.mrf.mxu0
  %v203 = vadd.f32 %v57, %v202
  %v204 = vpop.f32.mrf.mxu0
  %205 = vdwg.mxu0
  %v206 = vld [vmem:[%s3] sm:$0xff]
  %v207 = vld [vmem:[%s3 + $0x8] sm:$0xff]
  %v208 = vadd.f32 %v200, %v206
  %v209 = vadd.f32 %v203, %v207
  %210 = vst [vmem:[%s4] sm:$0xff] %v208
  %211 = vst [vmem:[%s4 + $0x8] sm:$0xff] %v209
  // Predicated region
  $region18: #{transformer_forward.17} parent=0 // pred_check
    _
  $region19: #{transformer_forward.17} parent=0 // pred_check_branch
    %213 = sbr.rel (0) target = $region21
  $region20: #{transformer_forward.17} parent=0 // pred_region
    _
  $region21: #{transformer_forward.17} parent=0 // pred_fallthru
    _
  // Predicated region
  $region22: #{transformer_forward.17} parent=0 // pred_check
    _
  $region23: #{transformer_forward.17} parent=0 // pred_check_branch
    %215 = sbr.rel (0) target = $region25
  $region24: #{transformer_forward.17} parent=0 // pred_region
    _
  $region25: #{transformer_forward.17} parent=0 // pred_fallthru
    _

// kernel: transformer_forward.23
$region0: #{transformer_forward.23}
  #allocation0 [shape = 'u32[]', space=smem, size = 0x4, offset = 0x4, fixed_abs, tag = 'smem constant byte address 0x4 - core index']
  #allocation1 [shape = 'u32[144,128]{1,0:T(1,128)}', space=vmem, size = 0x12000, scoped, tag = 'internal scratch']
  %s0 = inlined_call_operand.vmem [shape: bf16[16,256], index: 0, kind: input, shape index: {}]
  %s1 = inlined_call_operand.vmem [shape: bf16[256,128], index: 1, kind: input, shape index: {}]
  %s2 = inlined_call_operand.vmem [shape: f32[1,128], index: 2, kind: input, shape index: {}]
  %s3 = inlined_call_operand.vmem [shape: f32[16,128], index: 3, kind: input, shape index: {}]
  %s4 = inlined_call_operand.hbm [shape: f32[16,128], index: 4, kind: output, shape index: {}]
  %s5 = sld [smem:[#allocation0]]
  $region26: #{transformer_forward.23} parent=0
    _
  %s7 = ssub.s32 1, %s5
  %s8 = scalar_select 0, %s7, %s5
  $region1: #{transformer_forward.23} parent=0
    #allocation2 [shape = 'u8[8192]{0}', space=vmem, size = 0x2000, scoped, tag = 'output window, operand 0, single buffered']
    #allocation3 [shape = 's32[1]{0}', space=sflag, size = 0x4, scoped, tag = 'scoped memory for transformer_forward.23']
    %9 = vsyncpa [#allocation3], 0
    // Predicated region
    $region2: #{transformer_forward.23} parent=1 // pred_check
      _
    $region3: #{transformer_forward.23} parent=1 // pred_check_branch
      %11 = sbr.rel (0) target = $region5
    $region4: #{transformer_forward.23} parent=1 // pred_region
      _
    $region5: #{transformer_forward.23} parent=1 // pred_fallthru
      _
    // Predicated region
    $region6: #{transformer_forward.23} parent=1 // pred_check
      _
    $region7: #{transformer_forward.23} parent=1 // pred_check_branch
      %13 = sbr.rel (0) target = $region9
    $region8: #{transformer_forward.23} parent=1 // pred_region
      _
    $region9: #{transformer_forward.23} parent=1 // pred_fallthru
      _
    // Predicated region
    $region10: #{transformer_forward.23} parent=1 // pred_check
      _
    $region11: #{transformer_forward.23} parent=1 // pred_check_branch
      %15 = sbr.rel (0) target = $region13
    $region12: #{transformer_forward.23} parent=1 // pred_region
      _
    $region13: #{transformer_forward.23} parent=1 // pred_fallthru
      _
    // Predicated region
    $region14: #{transformer_forward.23} parent=1 // pred_check
      _
    $region15: #{transformer_forward.23} parent=1 // pred_check_branch
      %17 = sbr.rel (0) target = $region17
    $region16: #{transformer_forward.23} parent=1 // pred_region
      _
    $region17: #{transformer_forward.23} parent=1 // pred_fallthru
      _
    %v19 = vld [vmem:[%s0] sm:$0xff]
    %v20 = vld [vmem:[%s0 + $0x8] sm:$0xff]
    %v21 = vld [vmem:[%s1] sm:$0xf]
    %v22 = vld [vmem:[%s1 + $0x4] sm:$0xf]
    %v23 = vld [vmem:[%s1 + $0x8] sm:$0xf]
    %v24 = vld [vmem:[%s1 + $0xc] sm:$0xf]
    %v25 = vld [vmem:[%s1 + $0x10] sm:$0xf]
    %v26 = vld [vmem:[%s1 + $0x14] sm:$0xf]
    %v27 = vld [vmem:[%s1 + $0x18] sm:$0xf]
    %v28 = vld [vmem:[%s1 + $0x1c] sm:$0xf]
    %v29 = vld [vmem:[%s1 + $0x20] sm:$0xf]
    %v30 = vld [vmem:[%s1 + $0x24] sm:$0xf]
    %v31 = vld [vmem:[%s1 + $0x28] sm:$0xf]
    %v32 = vld [vmem:[%s1 + $0x2c] sm:$0xf]
    %v33 = vld [vmem:[%s1 + $0x30] sm:$0xf]
    %v34 = vld [vmem:[%s1 + $0x34] sm:$0xf]
    %v35 = vld [vmem:[%s1 + $0x38] sm:$0xf]
    %v36 = vld [vmem:[%s1 + $0x3c] sm:$0xf]
    %v37 = vld [vmem:[%s1 + $0x40] sm:$0xf]
    %v38 = vld [vmem:[%s1 + $0x44] sm:$0xf]
    %v39 = vld [vmem:[%s1 + $0x48] sm:$0xf]
    %v40 = vld [vmem:[%s1 + $0x4c] sm:$0xf]
    %v41 = vld [vmem:[%s1 + $0x50] sm:$0xf]
    %v42 = vld [vmem:[%s1 + $0x54] sm:$0xf]
    %v43 = vld [vmem:[%s1 + $0x58] sm:$0xf]
    %v44 = vld [vmem:[%s1 + $0x5c] sm:$0xf]
    %v45 = vld [vmem:[%s1 + $0x60] sm:$0xf]
    %v46 = vld [vmem:[%s1 + $0x64] sm:$0xf]
    %v47 = vld [vmem:[%s1 + $0x68] sm:$0xf]
    %v48 = vld [vmem:[%s1 + $0x6c] sm:$0xf]
    %v49 = vld [vmem:[%s1 + $0x70] sm:$0xf]
    %v50 = vld [vmem:[%s1 + $0x74] sm:$0xf]
    %v51 = vld [vmem:[%s1 + $0x78] sm:$0xf]
    %v52 = vld [vmem:[%s1 + $0x7c] sm:$0xf]
    %v53 = vld [vmem:[%s2] sm:$0x1]
    %v55 = vlaneseq
    %v56 = vshrl.u32 %v55, 7
    %v57 = vsub.s32 0, %v56
    %v58 = vrot.slane %v53, %v57
    %v62 = vunpack.c.l.b16 %v19
    %v63 = vunpack.c.h.b16 %v19
    %v64 = vunpack.c.l.b16 %v20
    %v65 = vunpack.c.h.b16 %v20
    %v66 = vpack.c.b16 %v64, %v62
    %v67 = vpack.c.b16 %v65, %v63
    %v102 = vunpack.c.l.b16 %v21
    %v103 = vunpack.c.l.b16 %v22
    %v104 = vunpack.c.l.b16 %v23
    %v105 = vunpack.c.l.b16 %v24
    %v106 = vunpack.c.l.b16 %v25
    %v107 = vunpack.c.l.b16 %v26
    %v108 = vunpack.c.l.b16 %v27
    %v109 = vunpack.c.l.b16 %v28
    %v110 = vunpack.c.l.b16 %v29
    %v111 = vunpack.c.l.b16 %v30
    %v112 = vunpack.c.l.b16 %v31
    %v113 = vunpack.c.l.b16 %v32
    %v114 = vunpack.c.l.b16 %v33
    %v115 = vunpack.c.l.b16 %v34
    %v116 = vunpack.c.l.b16 %v35
    %v117 = vunpack.c.l.b16 %v36
    %v118 = vunpack.c.l.b16 %v37
    %v119 = vunpack.c.l.b16 %v38
    %v120 = vunpack.c.l.b16 %v39
    %v121 = vunpack.c.l.b16 %v40
    %v122 = vunpack.c.l.b16 %v41
    %v123 = vunpack.c.l.b16 %v42
    %v124 = vunpack.c.l.b16 %v43
    %v125 = vunpack.c.l.b16 %v44
    %v126 = vunpack.c.l.b16 %v45
    %v127 = vunpack.c.l.b16 %v46
    %v128 = vunpack.c.l.b16 %v47
    %v129 = vunpack.c.l.b16 %v48
    %v130 = vunpack.c.l.b16 %v49
    %v131 = vunpack.c.l.b16 %v50
    %v132 = vunpack.c.l.b16 %v51
    %v133 = vunpack.c.l.b16 %v52
    %v134 = vpack.c.b16 %v103, %v102
    %v135 = vpack.c.b16 %v105, %v104
    %v136 = vpack.c.b16 %v107, %v106
    %v137 = vpack.c.b16 %v109, %v108
    %v138 = vpack.c.b16 %v111, %v110
    %v139 = vpack.c.b16 %v113, %v112
    %v140 = vpack.c.b16 %v115, %v114
    %v141 = vpack.c.b16 %v117, %v116
    %v142 = vpack.c.b16 %v119, %v118
    %v143 = vpack.c.b16 %v121, %v120
    %v144 = vpack.c.b16 %v123, %v122
    %v145 = vpack.c.b16 %v125, %v124
    %v146 = vpack.c.b16 %v127, %v126
    %v147 = vpack.c.b16 %v129, %v128
    %v148 = vpack.c.b16 %v131, %v130
    %v149 = vpack.c.b16 %v133, %v132
    %166 = vmatprep.subr.bf16.mxu0 0
    %167 = vmatpush1.bf16.msra.mxu0 %v141
    %168 = vmatprep.subr.bf16.mxu0 0
    %169 = vmatpush1.bf16.msra.mxu0 %v140
    %170 = vmatprep.subr.bf16.mxu0 0
    %171 = vmatpush1.bf16.msra.mxu0 %v139
    %172 = vmatprep.subr.bf16.mxu0 0
    %173 = vmatpush1.bf16.msra.mxu0 %v138
    %174 = vmatprep.subr.bf16.mxu0 0
    %175 = vmatpush1.bf16.msra.mxu0 %v137
    %176 = vmatprep.subr.bf16.mxu0 0
    %177 = vmatpush1.bf16.msra.mxu0 %v136
    %178 = vmatprep.subr.bf16.mxu0 0
    %179 = vmatpush1.bf16.msra.mxu0 %v135
    %180 = vmatprep.subr.bf16.mxu0 0
    %181 = vmatpush1.bf16.msra.mxu0 %v134
    %182 = vmatprep.subr.bf16.mxu0 0
    %183 = vmatpush2.bf16.msra.mxu0 %v149
    %184 = vmatprep.subr.bf16.mxu0 0
    %185 = vmatpush2.bf16.msra.mxu0 %v148
    %186 = vmatprep.subr.bf16.mxu0 0
    %187 = vmatpush2.bf16.msra.mxu0 %v147
    %188 = vmatprep.subr.bf16.mxu0 0
    %189 = vmatpush2.bf16.msra.mxu0 %v146
    %190 = vmatprep.subr.bf16.mxu0 0
    %191 = vmatpush2.bf16.msra.mxu0 %v145
    %192 = vmatprep.subr.bf16.mxu0 0
    %193 = vmatpush2.bf16.msra.mxu0 %v144
    %194 = vmatprep.subr.bf16.mxu0 0
    %195 = vmatpush2.bf16.msra.mxu0 %v143
    %196 = vmatprep.subr.bf16.mxu0 0
    %197 = vmatpush2.bf16.msra.mxu0 %v142
    %198 = vmatprep.mubr.bf16.mxu0 %v67
    %199 = vmatmul.mubr.bf16.gmra.mxu0 %v66
    %v200 = vpop.f32.mrf.mxu0
    %v201 = vadd.f32 %v58, %v200
    %v202 = vpop.f32.mrf.mxu0
    %v203 = vpop.f32.mrf.mxu0
    %v204 = vadd.f32 %v58, %v203
    %v205 = vpop.f32.mrf.mxu0
    %206 = vdwg.mxu0
    %v207 = vld [vmem:[%s3] sm:$0xff]
    %v208 = vld [vmem:[%s3 + $0x8] sm:$0xff]
    %v209 = vadd.f32 %v201, %v207
    %v210 = vadd.f32 %v204, %v208
    %211 = vst [vmem:[#allocation2] sm:$0xff] %v209
    %212 = vst [vmem:[#allocation2 + $0x8] sm:$0xff] %v210
    // Predicated region
    $region18: #{transformer_forward.23} parent=1 // pred_check
      _
    $region19: #{transformer_forward.23} parent=1 // pred_check_branch
      %214 = sbr.rel (0) target = $region21
    $region20: #{transformer_forward.23} parent=1 // pred_region
      %s216 = ssub.s32 256, 256
      %217 = vsyncadd [#allocation3], %s216
      %s218 = sshll.u32 [#allocation2], 4
      %s219 = int_to_ptr.vmem [resolvable:$true] %s218
      %224 = dma.vmem_to_hbm [thread:$0]  %s219, 256, %s4, [#allocation3], 128, 128, 8
    $region21: #{transformer_forward.23} parent=1 // pred_fallthru
      _
    // Predicated region
    $region22: #{transformer_forward.23} parent=1 // pred_check
      _
    $region23: #{transformer_forward.23} parent=1 // pred_check_branch
      %226 = sbr.rel (0) target = $region25
    $region24: #{transformer_forward.23} parent=1 // pred_region
      %227 = dma.done [#allocation3], 256
    $region25: #{transformer_forward.23} parent=1 // pred_fallthru
      _
    %228 = vsyncpa [#allocation3], 1

// kernel: transformer_forward.16
$region0: #{transformer_forward.16}
  #allocation0 [shape = 'u32[]', space=smem, size = 0x4, offset = 0x4, fixed_abs, tag = 'smem constant byte address 0x4 - core index']
  #allocation1 [shape = 'u32[144,128]{1,0:T(1,128)}', space=vmem, size = 0x12000, scoped, tag = 'internal scratch']
  %s0 = inlined_call_operand.vmem [shape: f32[16,128], index: 0, kind: input, shape index: {}]
  %s1 = inlined_call_operand.vmem [shape: f32[1,128], index: 1, kind: input, shape index: {}]
  %s2 = inlined_call_operand.vmem [shape: f32[1,128], index: 2, kind: input, shape index: {}]
  %s3 = inlined_call_operand.vmem [shape: bf16[128,256], index: 3, kind: input, shape index: {}]
  %s4 = inlined_call_operand.vmem [shape: f32[1,256], index: 4, kind: input, shape index: {}]
  %s5 = inlined_call_operand.vmem [shape: bf16[16,256], index: 5, kind: output, shape index: {}]
  %s6 = sld [smem:[#allocation0]]
  $region30: #{transformer_forward.16} parent=0
    _
  %s8 = ssub.s32 1, %s6
  %s9 = scalar_select 0, %s8, %s6
  // Predicated region
  $region2: #{transformer_forward.16} parent=0 // pred_check
    _
  $region3: #{transformer_forward.16} parent=0 // pred_check_branch
    %11 = sbr.rel (0) target = $region5
  $region4: #{transformer_forward.16} parent=0 // pred_region
    _
  $region5: #{transformer_forward.16} parent=0 // pred_fallthru
    _
  // Predicated region
  $region6: #{transformer_forward.16} parent=0 // pred_check
    _
  $region7: #{transformer_forward.16} parent=0 // pred_check_branch
    %13 = sbr.rel (0) target = $region9
  $region8: #{transformer_forward.16} parent=0 // pred_region
    _
  $region9: #{transformer_forward.16} parent=0 // pred_fallthru
    _
  // Predicated region
  $region10: #{transformer_forward.16} parent=0 // pred_check
    _
  $region11: #{transformer_forward.16} parent=0 // pred_check_branch
    %15 = sbr.rel (0) target = $region13
  $region12: #{transformer_forward.16} parent=0 // pred_region
    _
  $region13: #{transformer_forward.16} parent=0 // pred_fallthru
    _
  // Predicated region
  $region14: #{transformer_forward.16} parent=0 // pred_check
    _
  $region15: #{transformer_forward.16} parent=0 // pred_check_branch
    %17 = sbr.rel (0) target = $region17
  $region16: #{transformer_forward.16} parent=0 // pred_region
    _
  $region17: #{transformer_forward.16} parent=0 // pred_fallthru
    _
  // Predicated region
  $region18: #{transformer_forward.16} parent=0 // pred_check
    _
  $region19: #{transformer_forward.16} parent=0 // pred_check_branch
    %19 = sbr.rel (0) target = $region21
  $region20: #{transformer_forward.16} parent=0 // pred_region
    _
  $region21: #{transformer_forward.16} parent=0 // pred_fallthru
    _
  %v21 = vld [vmem:[%s0] sm:$0xff]
  %v22 = vld [vmem:[%s0 + $0x8] sm:$0xff]
  %23 = vadd.xlane.f32.xlu0 %v21
  %v24 = vpop.xlane.xlu0 %23
  %25 = vadd.xlane.f32.xlu0 %v22
  %v26 = vpop.xlane.xlu0 %25
  %v27 = vmul.f32 %v24, 0.0078125
  %v28 = vmul.f32 %v26, 0.0078125
  %v29 = vsub.f32 %v21, %v27
  %v30 = vsub.f32 %v22, %v28
  %v31 = vmul.f32 %v29, %v29
  %v32 = vmul.f32 %v30, %v30
  %33 = vadd.xlane.f32.xlu0 %v31
  %v34 = vpop.xlane.xlu0 %33
  %35 = vadd.xlane.f32.xlu0 %v32
  %v36 = vpop.xlane.xlu0 %35
  %v37 = vmul.f32 %v34, 0.0078125
  %v38 = vmul.f32 %v36, 0.0078125
  %v39 = vadd.f32 %v37, 1e-05
  %v40 = vadd.f32 %v38, 1e-05
  %v41 = vrsqrt.pop %v39
  %v42 = vrsqrt.pop %v40
  %v43 = vmul.f32 %v29, %v41
  %v44 = vmul.f32 %v30, %v42
  %v45 = vld [vmem:[%s1] sm:$0x1]
  %v47 = vlaneseq
  %v48 = vshrl.u32 %v47, 7
  %v49 = vsub.s32 0, %v48
  %v50 = vrot.slane %v45, %v49
  %v52 = vmul.f32 %v43, %v50
  %v53 = vmul.f32 %v44, %v50
  %v54 = vld [vmem:[%s2] sm:$0x1]
  %v56 = vlaneseq
  %v57 = vshrl.u32 %v56, 7
  %v58 = vsub.s32 0, %v57
  %v59 = vrot.slane %v54, %v58
  %v61 = vadd.f32 %v52, %v59
  %v62 = vadd.f32 %v53, %v59
  %v63 = vpack.c.bf16 %v62, %v61
  %v64 = vld [vmem:[%s3] sm:$0xff]
  %v65 = vld [vmem:[%s3 + $0x8] sm:$0xff]
  %v66 = vld [vmem:[%s3 + $0x10] sm:$0xff]
  %v67 = vld [vmem:[%s3 + $0x18] sm:$0xff]
  %v68 = vld [vmem:[%s3 + $0x20] sm:$0xff]
  %v69 = vld [vmem:[%s3 + $0x28] sm:$0xff]
  %v70 = vld [vmem:[%s3 + $0x30] sm:$0xff]
  %v71 = vld [vmem:[%s3 + $0x38] sm:$0xff]
  %v72 = vld [vmem:[%s3 + $0x40] sm:$0xff]
  %v73 = vld [vmem:[%s3 + $0x48] sm:$0xff]
  %v74 = vld [vmem:[%s3 + $0x50] sm:$0xff]
  %v75 = vld [vmem:[%s3 + $0x58] sm:$0xff]
  %v76 = vld [vmem:[%s3 + $0x60] sm:$0xff]
  %v77 = vld [vmem:[%s3 + $0x68] sm:$0xff]
  %v78 = vld [vmem:[%s3 + $0x70] sm:$0xff]
  %v79 = vld [vmem:[%s3 + $0x78] sm:$0xff]
  %v80 = vld [vmem:[%s4] sm:$0x3]
  %v82 = vlaneseq
  %v83 = vshrl.u32 %v82, 7
  %v84 = vsub.s32 0, %v83
  %v85 = vrot.slane %v80, %v84
  %v86 = vlaneseq
  %v87 = vshrl.u32 %v86, 7
  %v88 = vsub.s32 1, %v87
  %v89 = vrot.slane %v80, %v88
  %v108 = vunpack.c.l.b16 %v64
  %v109 = vunpack.c.h.b16 %v64
  %v110 = vunpack.c.l.b16 %v65
  %v111 = vunpack.c.h.b16 %v65
  %v112 = vunpack.c.l.b16 %v66
  %v113 = vunpack.c.h.b16 %v66
  %v114 = vunpack.c.l.b16 %v67
  %v115 = vunpack.c.h.b16 %v67
  %v116 = vunpack.c.l.b16 %v68
  %v117 = vunpack.c.h.b16 %v68
  %v118 = vunpack.c.l.b16 %v69
  %v119 = vunpack.c.h.b16 %v69
  %v120 = vunpack.c.l.b16 %v70
  %v121 = vunpack.c.h.b16 %v70
  %v122 = vunpack.c.l.b16 %v71
  %v123 = vunpack.c.h.b16 %v71
  %v124 = vunpack.c.l.b16 %v72
  %v125 = vunpack.c.h.b16 %v72
  %v126 = vunpack.c.l.b16 %v73
  %v127 = vunpack.c.h.b16 %v73
  %v128 = vunpack.c.l.b16 %v74
  %v129 = vunpack.c.h.b16 %v74
  %v130 = vunpack.c.l.b16 %v75
  %v131 = vunpack.c.h.b16 %v75
  %v132 = vunpack.c.l.b16 %v76
  %v133 = vunpack.c.h.b16 %v76
  %v134 = vunpack.c.l.b16 %v77
  %v135 = vunpack.c.h.b16 %v77
  %v136 = vunpack.c.l.b16 %v78
  %v137 = vunpack.c.h.b16 %v78
  %v138 = vunpack.c.l.b16 %v79
  %v139 = vunpack.c.h.b16 %v79
  %v140 = vpack.c.b16 %v110, %v108
  %v141 = vpack.c.b16 %v111, %v109
  %v142 = vpack.c.b16 %v114, %v112
  %v143 = vpack.c.b16 %v115, %v113
  %v144 = vpack.c.b16 %v118, %v116
  %v145 = vpack.c.b16 %v119, %v117
  %v146 = vpack.c.b16 %v122, %v120
  %v147 = vpack.c.b16 %v123, %v121
  %v148 = vpack.c.b16 %v126, %v124
  %v149 = vpack.c.b16 %v127, %v125
  %v150 = vpack.c.b16 %v130, %v128
  %v151 = vpack.c.b16 %v131, %v129
  %v152 = vpack.c.b16 %v134, %v132
  %v153 = vpack.c.b16 %v135, %v133
  %v154 = vpack.c.b16 %v138, %v136
  %v155 = vpack.c.b16 %v139, %v137
  %172 = vmatprep.subr.bf16.mxu0 %v155
  %173 = vmatpush1.bf16.msra.mxu0 %v154
  %174 = vmatprep.subr.bf16.mxu0 %v153
  %175 = vmatpush1.bf16.msra.mxu0 %v152
  %176 = vmatprep.subr.bf16.mxu0 %v151
  %177 = vmatpush1.bf16.msra.mxu0 %v150
  %178 = vmatprep.subr.bf16.mxu0 %v149
  %179 = vmatpush1.bf16.msra.mxu0 %v148
  %180 = vmatprep.subr.bf16.mxu0 %v147
  %181 = vmatpush1.bf16.msra.mxu0 %v146
  %182 = vmatprep.subr.bf16.mxu0 %v145
  %183 = vmatpush1.bf16.msra.mxu0 %v144
  %184 = vmatprep.subr.bf16.mxu0 %v143
  %185 = vmatpush1.bf16.msra.mxu0 %v142
  %186 = vmatprep.subr.bf16.mxu0 %v141
  %187 = vmatpush1.bf16.msra.mxu0 %v140
  %188 = vmatprep.subr.bf16.mxu0 0
  %189 = vmatpush2.bf16.msra.mxu0 0
  %190 = vmatprep.subr.bf16.mxu0 0
  %191 = vmatpush2.bf16.msra.mxu0 0
  %192 = vmatprep.subr.bf16.mxu0 0
  %193 = vmatpush2.bf16.msra.mxu0 0
  %194 = vmatprep.subr.bf16.mxu0 0
  %195 = vmatpush2.bf16.msra.mxu0 0
  %196 = vmatprep.subr.bf16.mxu0 0
  %197 = vmatpush2.bf16.msra.mxu0 0
  %198 = vmatprep.subr.bf16.mxu0 0
  %199 = vmatpush2.bf16.msra.mxu0 0
  %200 = vmatprep.subr.bf16.mxu0 0
  %201 = vmatpush2.bf16.msra.mxu0 0
  %202 = vmatprep.subr.bf16.mxu0 0
  %203 = vmatpush2.bf16.msra.mxu0 0
  %204 = vmatprep.mubr.bf16.mxu0 0
  %205 = vmatmul.mubr.bf16.gmra.mxu0 %v63
  %v206 = vpop.f32.mrf.mxu0
  %v207 = vadd.f32 %v85, %v206
  %v208 = vpop.f32.mrf.mxu0
  %v209 = vadd.f32 %v89, %v208
  %v210 = vpop.f32.mrf.mxu0
  %v211 = vadd.f32 %v85, %v210
  %v212 = vpop.f32.mrf.mxu0
  %v213 = vadd.f32 %v89, %v212
  %214 = vdwg.mxu0
  %v215 = vmul.f32 %v207, 0.5
  %v216 = vmul.f32 %v209, 0.5
  %v217 = vmul.f32 %v211, 0.5
  %v218 = vmul.f32 %v213, 0.5
  %v219 = vmul.f32 %v207, 0.70710677
  %v220 = vmul.f32 %v209, 0.70710677
  %v221 = vmul.f32 %v211, 0.70710677
  %v222 = vmul.f32 %v213, 0.70710677
  %v223 = vand.u32 2147483647, %v219
  %v224 = vand.u32 2147483647, %v220
  %v225 = vand.u32 2147483647, %v221
  %v226 = vand.u32 2147483647, %v222
  %v227 = vmul.f32 %v223, 0.3275911
  %v228 = vmul.f32 %v224, 0.3275911
  %v229 = vmul.f32 %v225, 0.3275911
  %v230 = vmul.f32 %v226, 0.3275911
  %v231 = vadd.f32 %v227, 1.0
  %v232 = vadd.f32 %v228, 1.0
  %v233 = vadd.f32 %v229, 1.0
  %v234 = vadd.f32 %v230, 1.0
  %v235 = vrcp.pop %v231
  %v236 = vmul.f32 1.0, %v235
  %v237 = vrcp.pop %v232
  %v238 = vmul.f32 1.0, %v237
  %v239 = vrcp.pop %v233
  %v240 = vmul.f32 1.0, %v239
  %v241 = vrcp.pop %v234
  %v242 = vmul.f32 1.0, %v241
  %v243 = vmul.f32 %v236, 1.0614054
  %v244 = vmul.f32 %v238, 1.0614054
  %v245 = vmul.f32 %v240, 1.0614054
  %v246 = vmul.f32 %v242, 1.0614054
  %v247 = vadd.f32 %v243, -1.4531521
  %v248 = vadd.f32 %v244, -1.4531521
  %v249 = vadd.f32 %v245, -1.4531521
  %v250 = vadd.f32 %v246, -1.4531521
  %v251 = vmul.f32 %v247, %v236
  %v252 = vmul.f32 %v248, %v238
  %v253 = vmul.f32 %v249, %v240
  %v254 = vmul.f32 %v250, %v242
  %v255 = vadd.f32 %v251, 1.4214138
  %v256 = vadd.f32 %v252, 1.4214138
  %v257 = vadd.f32 %v253, 1.4214138
  %v258 = vadd.f32 %v254, 1.4214138
  %v259 = vmul.f32 %v255, %v236
  %v260 = vmul.f32 %v256, %v238
  %v261 = vmul.f32 %v257, %v240
  %v262 = vmul.f32 %v258, %v242
  %v263 = vadd.f32 %v259, -0.28449672
  %v264 = vadd.f32 %v260, -0.28449672
  %v265 = vadd.f32 %v261, -0.28449672
  %v266 = vadd.f32 %v262, -0.28449672
  %v267 = vmul.f32 %v263, %v236
  %v268 = vmul.f32 %v264, %v238
  %v269 = vmul.f32 %v265, %v240
  %v270 = vmul.f32 %v266, %v242
  %v271 = vadd.f32 %v267, 0.2548296
  %v272 = vadd.f32 %v268, 0.2548296
  %v273 = vadd.f32 %v269, 0.2548296
  %v274 = vadd.f32 %v270, 0.2548296
  %v275 = vmul.f32 %v271, %v236
  %v276 = vmul.f32 %v272, %v238
  %v277 = vmul.f32 %v273, %v240
  %v278 = vmul.f32 %v274, %v242
  %v279 = vsub.f32 0.0, %v223
  %v280 = vsub.f32 0.0, %v224
  %v281 = vsub.f32 0.0, %v225
  %v282 = vsub.f32 0.0, %v226
  %v283 = vmul.f32 %v279, %v223
  %v284 = vmul.f32 %v280, %v224
  %v285 = vmul.f32 %v281, %v225
  %v286 = vmul.f32 %v282, %v226
  %v287 = vmul.f32 %v283, 1.442695
  %v288 = vpow.pop %v287
  %v289 = vmul.f32 %v284, 1.442695
  %v290 = vpow.pop %v289
  %v291 = vmul.f32 %v285, 1.442695
  %v292 = vpow.pop %v291
  %v293 = vmul.f32 %v286, 1.442695
  %v294 = vpow.pop %v293
  %v295 = vmul.f32 %v275, %v288
  %v296 = vmul.f32 %v276, %v290
  %v297 = vmul.f32 %v277, %v292
  %v298 = vmul.f32 %v278, %v294
  %v299 = vsub.f32 1.0, %v295
  %v300 = vsub.f32 1.0, %v296
  %v301 = vsub.f32 1.0, %v297
  %v302 = vsub.f32 1.0, %v298
  %vm303 = vcmp.lt.f32.partialorder %v219, 0.0
  %vm304 = vcmp.lt.f32.partialorder %v220, 0.0
  %vm305 = vcmp.lt.f32.partialorder %v221, 0.0
  %vm306 = vcmp.lt.f32.partialorder %v222, 0.0
  %v307 = vsub.f32 0.0, %v299
  %v308 = vsub.f32 0.0, %v300
  %v309 = vsub.f32 0.0, %v301
  %v310 = vsub.f32 0.0, %v302
  %v311 = vsel %vm303, %v307, %v299
  %v312 = vsel %vm304, %v308, %v300
  %v313 = vsel %vm305, %v309, %v301
  %v314 = vsel %vm306, %v310, %v302
  %v315 = vadd.f32 %v311, 1.0
  %v316 = vadd.f32 %v312, 1.0
  %v317 = vadd.f32 %v313, 1.0
  %v318 = vadd.f32 %v314, 1.0
  %v319 = vmul.f32 %v215, %v315
  %v320 = vmul.f32 %v216, %v316
  %v321 = vmul.f32 %v217, %v317
  %v322 = vmul.f32 %v218, %v318
  %v323 = vpack.c.bf16 %v321, %v319
  %v324 = vpack.c.bf16 %v322, %v320
  %v327 = vunpack.c.l.b16 %v323
  %v328 = vunpack.c.l.b16 %v324
  %v329 = vunpack.c.h.b16 %v323
  %v330 = vunpack.c.h.b16 %v324
  %v331 = vpack.c.b16 %v328, %v327
  %v332 = vpack.c.b16 %v330, %v329
  %335 = vst [vmem:[%s5] sm:$0xff] %v331
  %336 = vst [vmem:[%s5 + $0x8] sm:$0xff] %v332
  // Predicated region
  $region22: #{transformer_forward.16} parent=0 // pred_check
    _
  $region23: #{transformer_forward.16} parent=0 // pred_check_branch
    %338 = sbr.rel (0) target = $region25
  $region24: #{transformer_forward.16} parent=0 // pred_region
    _
  $region25: #{transformer_forward.16} parent=0 // pred_fallthru
    _
  // Predicated region
  $region26: #{transformer_forward.16} parent=0 // pred_check
    _
  $region27: #{transformer_forward.16} parent=0 // pred_check_branch
    %340 = sbr.rel (0) target = $region29
  $region28: #{transformer_forward.16} parent=0 // pred_region
    _
  $region29: #{transformer_forward.16} parent=0 // pred_fallthru
    _

</llo_original>
